<compile_context>
chip_gen: v7x
topology: tpu7x:2x2x1
jax: 0.10.0
libtpu: 0.0.40
codegen_flags: <defaults>
</compile_context>

<pallas_src>
import math
from functools import partial

import jax
import jax.numpy as jnp
from jax import lax
from jax.experimental import pallas as pl
from jax.experimental.pallas import tpu as pltpu


def _round_up(x, m):
    return (x + m - 1) // m * m


def _vmem_limit_bytes():
    """Generation-aware scoped-VMEM limit (v5e/v6e: 128 MiB phys, v7x: 64 MiB)."""
    try:
        cap = int(pltpu.get_tpu_info().vmem_capacity_bytes)
    except Exception:
        cap = 64 * 1024 * 1024          # conservative fallback (v7x-sized)
    return min(cap * 3 // 4, 100 * 1024 * 1024)


_VMEM_LIMIT = _vmem_limit_bytes()


def _choose_tiles(np_, d):
    """Pick (TM, TK). Prefer TK = N (z slab resident, minimal HBM traffic);
    K-tile only when the VMEM budget demands it (v7x at large N*D)."""
    cw_pad = _round_up(4 * d + 2, 128)
    c4_pad = _round_up(4 * d, 128)
    tm = 512 if (np_ % 512 == 0 and np_ // 512 >= 2) else 256
    tm = min(tm, np_)

    def vmem_use(tk):
        return (2 * tm * tk * 2            # adj block, bf16, double buffered
                + 2 * tk * cw_pad * 2      # zm block, bf16 (conservatively x2)
                + 2 * tm * cw_pad * 4      # zr block, f32
                + 2 * tm * c4_pad * 4      # output block, f32
                + tm * cw_pad * 4          # f32 accumulator scratch
                + (2 << 20))               # headroom

    for tk in (np_, 4096, 2048, 1024, 512, 256):
        if tk <= np_ and np_ % tk == 0 and vmem_use(tk) <= _VMEM_LIMIT:
            return tm, tk
    return tm, 256


# ----------------------------------------------------------------------------
# Kernel 1: fused GCN propagation for BOTH augmented views + BOTH negatives.
#
#   adj   : raw binary adjacency block (TM, TK) bf16   (read once, both views)
#   zm    : [keep1*z1 | keep2*z2 | keep1 | keep2 | 0-pad]  (TK, CWp) bf16
#   zr    : [z1 | z2 | keep1 | keep2 | 0-pad]              (TM, CWp) f32
#   out   : h_all = [h1 | h3 | h2 | h4]                    (TM, 4D)  f32
#
# Accumulate adj @ zm over the K axis (f32 scratch), then finalize per row:
#   deg_v = keep_v * (adj @ keep_v) + 1
#   h     = relu((keep_v * acc + z_self) / deg_v + b)
# ----------------------------------------------------------------------------
def _gcn_prop_kernel(adj_ref, zm_ref, zr_ref, b_ref, h_ref, acc_ref):
    k = pl.program_id(1)

    @pl.when(k == 0)
    def _init():
        acc_ref[...] = jnp.zeros_like(acc_ref)

    # bf16 x bf16 MXU matmul, f32 accumulate — operands arrive bf16 from HBM.
    acc_ref[...] += jnp.dot(adj_ref[...], zm_ref[...],
                            preferred_element_type=jnp.float32)

    @pl.when(k == pl.num_programs(1) - 1)
    def _finalize():
        c4 = h_ref.shape[1]            # 4*D
        d2 = c4 // 2                   # 2*D
        acc = acc_ref[...]
        zr = zr_ref[...]
        b = b_ref[...]                 # (1, 2D)

        kr1 = zr[:, c4:c4 + 1]                       # row keep flags (TM, 1)
        kr2 = zr[:, c4 + 1:c4 + 2]
        deg1 = kr1 * acc[:, c4:c4 + 1] + 1.0         # masked degree + self loop
        deg2 = kr2 * acc[:, c4 + 1:c4 + 2] + 1.0

        num1 = kr1 * acc[:, :d2] + zr[:, :d2]        # row mask + self-loop add
        num2 = kr2 * acc[:, d2:c4] + zr[:, d2:c4]

        h_ref[:, :d2] = jnp.maximum(num1 / deg1 + b, 0.0)   # [h1 | h3]
        h_ref[:, d2:] = jnp.maximum(num2 / deg2 + b, 0.0)   # [h2 | h4]


def gcn_propagate_fused(adj_b, zm, zr, bias2, d, tm, tk):
    np_, cwp = zm.shape
    c4 = 4 * d
    d2 = 2 * d
    return pl.pallas_call(
        _gcn_prop_kernel,
        out_shape=jax.ShapeDtypeStruct((np_, c4), jnp.float32),
        grid=(np_ // tm, np_ // tk),
        in_specs=[
            pl.BlockSpec((tm, tk), lambda i, k: (i, k)),     # raw adjacency
            pl.BlockSpec((tk, cwp), lambda i, k: (k, 0)),    # masked z slab
            pl.BlockSpec((tm, cwp), lambda i, k: (i, 0)),    # self-loop rows
            pl.BlockSpec((1, d2), lambda i, k: (0, 0)),      # bias [b|b]
        ],
        out_specs=pl.BlockSpec((tm, c4), lambda i, k: (i, 0)),
        scratch_shapes=[pltpu.VMEM((tm, cwp), jnp.float32)],
        compiler_params=pltpu.CompilerParams(
            dimension_semantics=("parallel", "arbitrary"),
            vmem_limit_bytes=_VMEM_LIMIT),
    )(adj_b, zm, zr, bias2)


# ----------------------------------------------------------------------------
# Kernel 2: bilinear discriminator scores, row-tiled and lane-dense.
#
#   u_rows : (8, 4D) bf16 — rows 0..3 hold (W0 @ c) placed in the column slot
#            of the h view they score (built in the wrapper); rows 4..7 zero
#            (sublane padding so the output store is full-tile).
#   h_all  : (TM, 4D) f32 row tile of [h1 | h3 | h2 | h4]
#   out    : (8, TM) logits block; rows 0..3 = sc_1..sc_4.
# ----------------------------------------------------------------------------
def _disc_kernel(u_ref, h_ref, b_ref, out_ref):
    dn = (((1,), (1,)), ((), ()))          # contract last-with-last (A @ B^T)
    scores = lax.dot_general(u_ref[...], h_ref[...].astype(jnp.bfloat16),
                             dn, preferred_element_type=jnp.float32)
    out_ref[...] = scores + b_ref[0]


def dgi_scores(u_rows, h_all, b_bil, tm):
    np_, c4 = h_all.shape
    return pl.pallas_call(
        _disc_kernel,
        out_shape=jax.ShapeDtypeStruct((8, np_), jnp.float32),
        grid=(np_ // tm,),
        in_specs=[
            pl.BlockSpec((8, c4), lambda i: (0, 0)),
            pl.BlockSpec((tm, c4), lambda i: (i, 0)),
            pl.BlockSpec(memory_space=pltpu.MemorySpace.SMEM),   # scalar bias
        ],
        out_specs=pl.BlockSpec((8, tm), lambda i: (0, i)),
        compiler_params=pltpu.CompilerParams(
            dimension_semantics=("parallel",),
            vmem_limit_bytes=_VMEM_LIMIT),
    )(u_rows, h_all, b_bil)


# ----------------------------------------------------------------------------
# Glue: DropNodes, shuffle, projection (XLA), jitted fixed-shape forward.
# ----------------------------------------------------------------------------
@partial(jax.jit, static_argnames=("aug1_p", "aug2_p"))
def dgi_forward_padded(key, x, adj, params, aug1_p=0.1, aug2_p=0.1):
    """Fixed-shape forward: padded logits (8, Np), h_all (Np, 4D), msk (Np,)."""
    w_enc, b_enc, w_bil, b_bil = params
    N = x.shape[0]
    D = w_enc.shape[1]
    Np = max(_round_up(N, 256), 256)
    pad = Np - N
    k1, k2, k3 = jax.random.split(key, 3)

    # DropNodes(p): drop each node with prob p. Padded nodes are always dropped.
    keep1 = jnp.pad(jax.random.bernoulli(k1, 1.0 - aug1_p, (N,)), (0, pad))
    keep2 = jnp.pad(jax.random.bernoulli(k2, 1.0 - aug2_p, (N,)), (0, pad))
    msk = jnp.logical_and(keep1, keep2)
    k1f = keep1.astype(jnp.float32)[:, None]
    k2f = keep2.astype(jnp.float32)[:, None]

    x_p = jnp.pad(x, ((0, pad), (0, 0)))
    # Raw binary adjacency fed to the kernel in bf16 (exact for 0/1, half the DMA).
    # TODO(synk): on v7x the binary adjacency could be fed as fp8 (also exact) to
    # halve the dominant HBM stream again; kept bf16 for cross-generation support.
    adj_b = jnp.pad(adj, ((0, pad), (0, pad))).astype(jnp.bfloat16)

    # One projection for all four views (XLA): row masking and the shuffle
    # permutation both commute with the right-multiply by W.
    xw = x_p @ w_enc                                        # (Np, D) f32
    shuf = jnp.concatenate([jax.random.permutation(k3, N),
                            jnp.arange(N, Np, dtype=jnp.int32)])
    xw1 = xw * k1f
    xw2 = xw * k2f
    z1 = jnp.concatenate([xw1, xw1[shuf]], axis=1)          # (Np, 2D) [pos | neg] v1
    z2 = jnp.concatenate([xw2, xw2[shuf]], axis=1)          # (Np, 2D) [pos | neg] v2

    cw = 4 * D + 2
    cwp = _round_up(cw, 128)
    extra = [jnp.zeros((Np, cwp - cw), jnp.float32)] if cwp > cw else []
    # Matmul RHS: column keep folded into z + keep columns for in-kernel degree.
    zm = jnp.concatenate([z1 * k1f, z2 * k2f, k1f, k2f] + extra,
                         axis=1).astype(jnp.bfloat16)       # (Np, CWp) bf16
    # Self-loop rows + row keep flags (f32, row-tiled in the kernel).
    zr = jnp.concatenate([z1, z2, k1f, k2f] + extra, axis=1)
    bias2 = jnp.concatenate([b_enc, b_enc], axis=1)         # (1, 2D)

    tm, tk = _choose_tiles(Np, D)
    h_all = gcn_propagate_fused(adj_b, zm, zr, bias2, D, tm, tk)  # (Np, 4D)

    # Masked AvgReadout + sigmoid + u = W0 @ c (tiny -> XLA; slices fuse into
    # the reductions, so no (N, D) copies are materialized).
    mask_f = msk.astype(jnp.float32)
    inv_cnt = 1.0 / jnp.maximum(jnp.sum(mask_f), 1.0)
    c1 = jax.nn.sigmoid((mask_f @ h_all[:, :D]) * inv_cnt)          # view 1 (h1)
    c2 = jax.nn.sigmoid((mask_f @ h_all[:, 2 * D:3 * D]) * inv_cnt) # view 2 (h2)
    u1 = w_bil @ c1
    u2 = w_bil @ c2
    zD = jnp.zeros((D,), jnp.float32)
    u_rows = jnp.concatenate([
        jnp.stack([
            jnp.concatenate([zD, zD, u1, zD]),   # sc_1 = f_k(h2, c1)
            jnp.concatenate([u2, zD, zD, zD]),   # sc_2 = f_k(h1, c2)
            jnp.concatenate([zD, zD, zD, u1]),   # sc_3 = f_k(h4, c1)
            jnp.concatenate([zD, u2, zD, zD]),   # sc_4 = f_k(h3, c2)
        ]),
        jnp.zeros((4, 4 * D), jnp.float32),      # sublane padding to 8 rows
    ], axis=0).astype(jnp.bfloat16)

    logits_full = dgi_scores(u_rows, h_all, b_bil, tm)      # (8, Np)
    return logits_full, h_all, msk


def dgi_forward(key, x, adj, params, aug1_p=0.1, aug2_p=0.1):
    logits_full, h_all, msk = dgi_forward_padded(
        key, x, adj, params, aug1_p=aug1_p, aug2_p=aug2_p)
    D = params[0].shape[1]
    # Final dynamic-shape boolean gather (torch's `[msk]`) stays in eager JAX.
    logits = jnp.concatenate([logits_full[r][msk] for r in range(4)], axis=0)
    h_1 = h_all[:, :D][msk]
    h_2 = h_all[:, 2 * D:3 * D][msk]
    return logits, h_1, h_2, int(jnp.sum(msk))


def init_params(key, in_dim, emb_dim):
    k_enc, k_bil = jax.random.split(key)
    lim_e = math.sqrt(6.0 / (in_dim + emb_dim))
    w_enc = jax.random.uniform(k_enc, (in_dim, emb_dim), jnp.float32, -lim_e, lim_e)
    b_enc = jnp.zeros((1, emb_dim), jnp.float32)
    # nn.Bilinear(emb_dim, emb_dim, 1): weight (1, D, D) xavier_uniform, bias 0.
    fan_in = emb_dim * emb_dim
    fan_out = emb_dim
    lim_b = math.sqrt(6.0 / (fan_in + fan_out))
    w_bil = jax.random.uniform(k_bil, (emb_dim, emb_dim), jnp.float32, -lim_b, lim_b)
    b_bil = jnp.zeros((1,), jnp.float32)
    return w_enc, b_enc, w_bil, b_bil


if __name__ == "__main__":
    key = jax.random.PRNGKey(0)
    k_x, k_adj, k_p, k_fwd = jax.random.split(key, 4)

    N, F, D = 256, 64, 64          # nodes, input feat dim, embedding dim
    x = jax.random.normal(k_x, (N, F), jnp.float32)
    a = (jax.random.uniform(k_adj, (N, N)) < 0.05).astype(jnp.float32)
    adj = jnp.maximum(a, a.T) * (1.0 - jnp.eye(N, dtype=jnp.float32))
    adj = adj.astype(jnp.bfloat16)   # binary adjacency: bf16 exact, halves kernel DMA

    params = init_params(k_p, F, D)

    logits, h_1, h_2, n_kept = dgi_forward(k_fwd, x, adj, params,
                                           aug1_p=0.1, aug2_p=0.1)
    jax.block_until_ready((logits, h_1, h_2))

    assert logits.shape == (4 * n_kept,)
    assert h_1.shape == (n_kept, D) and h_2.shape == (n_kept, D)
    assert 0 < n_kept <= N
    print("KERNEL_OK")
</pallas_src>

<mosaic_0001>
module attributes {stable_mosaic.version = 11 : i64} {
  func.func @_gcn_prop_kernel(%arg0: i32, %arg1: i32, %arg2: memref<256x256xbf16, #tpu.memory_space<vmem>>, %arg3: memref<256x384xbf16, #tpu.memory_space<vmem>>, %arg4: memref<256x384xf32, #tpu.memory_space<vmem>>, %arg5: memref<1x128xf32, #tpu.memory_space<vmem>>, %arg6: memref<256x256xf32, #tpu.memory_space<vmem>>, %arg7: memref<256x384xf32, #tpu.memory_space<vmem>>) attributes {dimension_semantics = [#tpu.dimension_semantics<parallel>, #tpu.dimension_semantics<arbitrary>], iteration_bounds = array<i64: 1, 1>, scalar_prefetch = 0 : i64, scratch_operands = 1 : i64, tpu.core_type = #tpu.core_type<tc>, window_params = [{transform_indices = @transform_0, window_bounds = array<i64: 256, 256>}, {transform_indices = @transform_1, window_bounds = array<i64: 256, 384>}, {transform_indices = @transform_2, window_bounds = array<i64: 256, 384>}, {pipeline_mode = #tpu.pipeline_mode<synchronous>, transform_indices = @transform_3, window_bounds = array<i64: 1, 128>}, {transform_indices = @transform_4, window_bounds = array<i64: 256, 256>}]} {
    %c0_i32 = arith.constant 0 : i32
    %0 = arith.cmpi eq, %arg1, %c0_i32 : i32
    %1 = arith.extui %0 : i1 to i32
    %c0_i32_0 = arith.constant 0 : i32
    %2 = arith.cmpi ne, %1, %c0_i32_0 : i32
    scf.if %2 {
      %cst_10 = arith.constant 0.000000e+00 : f32
      %12 = vector.broadcast %cst_10 : f32 to vector<256x384xf32>
      %c0_11 = arith.constant 0 : index
      %c0_12 = arith.constant 0 : index
      %13 = vector.load %arg7[%c0_11, %c0_12] : memref<256x384xf32, #tpu.memory_space<vmem>>, vector<256x384xf32>
      tpu.vector_store %arg7[%c0_11, %c0_12], %12 {strides = array<i32>} : memref<256x384xf32, #tpu.memory_space<vmem>>, vector<256x384xf32>,
    } else {
    }
    %c0 = arith.constant 0 : index
    %c0_1 = arith.constant 0 : index
    %3 = vector.load %arg7[%c0, %c0_1] : memref<256x384xf32, #tpu.memory_space<vmem>>, vector<256x384xf32>
    %c0_2 = arith.constant 0 : index
    %c0_3 = arith.constant 0 : index
    %4 = vector.load %arg2[%c0_2, %c0_3] : memref<256x256xbf16, #tpu.memory_space<vmem>>, vector<256x256xbf16>
    %c0_4 = arith.constant 0 : index
    %c0_5 = arith.constant 0 : index
    %5 = vector.load %arg3[%c0_4, %c0_5] : memref<256x384xbf16, #tpu.memory_space<vmem>>, vector<256x384xbf16>
    %cst = arith.constant dense<0.000000e+00> : vector<256x384xf32>
    %6 = tpu.matmul %4, %5, %cst {dimension_numbers = #tpu.dot_dimension_numbers<[1], [0], [0], [1], [0, 0, 1, 1], [], []>} : vector<256x256xbf16>, vector<256x384xbf16>, vector<256x384xf32> -> vector<256x384xf32>
    %7 = arith.addf %3, %6 : vector<256x384xf32>
    %c0_6 = arith.constant 0 : index
    %c0_7 = arith.constant 0 : index
    %8 = vector.load %arg7[%c0_6, %c0_7] : memref<256x384xf32, #tpu.memory_space<vmem>>, vector<256x384xf32>
    tpu.vector_store %arg7[%c0_6, %c0_7], %7 {strides = array<i32>} : memref<256x384xf32, #tpu.memory_space<vmem>>, vector<256x384xf32>,
    %c0_i32_8 = arith.constant 0 : i32
    %9 = arith.cmpi eq, %arg1, %c0_i32_8 : i32
    %10 = arith.extui %9 : i1 to i32
    %c0_i32_9 = arith.constant 0 : i32
    %11 = arith.cmpi ne, %10, %c0_i32_9 : i32
    scf.if %11 {
      %c0_10 = arith.constant 0 : index
      %c0_11 = arith.constant 0 : index
      %12 = vector.load %arg7[%c0_10, %c0_11] : memref<256x384xf32, #tpu.memory_space<vmem>>, vector<256x384xf32>
      %c0_12 = arith.constant 0 : index
      %c0_13 = arith.constant 0 : index
      %13 = vector.load %arg4[%c0_12, %c0_13] : memref<256x384xf32, #tpu.memory_space<vmem>>, vector<256x384xf32>
      %c0_14 = arith.constant 0 : index
      %c0_15 = arith.constant 0 : index
      %14 = vector.load %arg5[%c0_14, %c0_15] : memref<1x128xf32, #tpu.memory_space<vmem>>, vector<1x128xf32>
      %15 = vector.extract_strided_slice %13 {offsets = [0, 256], sizes = [256, 1], strides = [1, 1]} : vector<256x384xf32> to vector<256x1xf32>
      %16 = vector.extract_strided_slice %13 {offsets = [0, 257], sizes = [256, 1], strides = [1, 1]} : vector<256x384xf32> to vector<256x1xf32>
      %17 = vector.extract_strided_slice %12 {offsets = [0, 256], sizes = [256, 1], strides = [1, 1]} : vector<256x384xf32> to vector<256x1xf32>
      %18 = arith.mulf %15, %17 : vector<256x1xf32>
      %cst_16 = arith.constant 1.000000e+00 : f32
      %19 = vector.broadcast %cst_16 : f32 to vector<256x1xf32>
      %20 = arith.addf %18, %19 : vector<256x1xf32>
      %21 = vector.extract_strided_slice %12 {offsets = [0, 257], sizes = [256, 1], strides = [1, 1]} : vector<256x384xf32> to vector<256x1xf32>
      %22 = arith.mulf %16, %21 : vector<256x1xf32>
      %cst_17 = arith.constant 1.000000e+00 : f32
      %23 = vector.broadcast %cst_17 : f32 to vector<256x1xf32>
      %24 = arith.addf %22, %23 : vector<256x1xf32>
      %25 = vector.extract_strided_slice %12 {offsets = [0, 0], sizes = [256, 128], strides = [1, 1]} : vector<256x384xf32> to vector<256x128xf32>
      %26 = vector.broadcast %15 : vector<256x1xf32> to vector<256x128xf32>
      %27 = arith.mulf %26, %25 : vector<256x128xf32>
      %28 = vector.extract_strided_slice %13 {offsets = [0, 0], sizes = [256, 128], strides = [1, 1]} : vector<256x384xf32> to vector<256x128xf32>
      %29 = arith.addf %27, %28 : vector<256x128xf32>
      %30 = vector.extract_strided_slice %12 {offsets = [0, 128], sizes = [256, 128], strides = [1, 1]} : vector<256x384xf32> to vector<256x128xf32>
      %31 = vector.broadcast %16 : vector<256x1xf32> to vector<256x128xf32>
      %32 = arith.mulf %31, %30 : vector<256x128xf32>
      %33 = vector.extract_strided_slice %13 {offsets = [0, 128], sizes = [256, 128], strides = [1, 1]} : vector<256x384xf32> to vector<256x128xf32>
      %34 = arith.addf %32, %33 : vector<256x128xf32>
      %35 = vector.broadcast %20 : vector<256x1xf32> to vector<256x128xf32>
      %36 = arith.divf %29, %35 : vector<256x128xf32>
      %37 = vector.broadcast %14 : vector<1x128xf32> to vector<256x128xf32>
      %38 = arith.addf %36, %37 : vector<256x128xf32>
      %cst_18 = arith.constant 0.000000e+00 : f32
      %39 = vector.broadcast %cst_18 : f32 to vector<256x128xf32>
      %40 = arith.maximumf %38, %39 : vector<256x128xf32>
      %c0_19 = arith.constant 0 : index
      %c0_20 = arith.constant 0 : index
      %41 = vector.load %arg6[%c0_19, %c0_20] : memref<256x256xf32, #tpu.memory_space<vmem>>, vector<256x128xf32>
      tpu.vector_store %arg6[%c0_19, %c0_20], %40 {strides = array<i32>} : memref<256x256xf32, #tpu.memory_space<vmem>>, vector<256x128xf32>,
      %42 = vector.broadcast %24 : vector<256x1xf32> to vector<256x128xf32>
      %43 = arith.divf %34, %42 : vector<256x128xf32>
      %44 = vector.broadcast %14 : vector<1x128xf32> to vector<256x128xf32>
      %45 = arith.addf %43, %44 : vector<256x128xf32>
      %cst_21 = arith.constant 0.000000e+00 : f32
      %46 = vector.broadcast %cst_21 : f32 to vector<256x128xf32>
      %47 = arith.maximumf %45, %46 : vector<256x128xf32>
      %c0_22 = arith.constant 0 : index
      %c128 = arith.constant 128 : index
      %48 = vector.load %arg6[%c0_22, %c128] : memref<256x256xf32, #tpu.memory_space<vmem>>, vector<256x128xf32>
      tpu.vector_store %arg6[%c0_22, %c128], %47 {strides = array<i32>} : memref<256x256xf32, #tpu.memory_space<vmem>>, vector<256x128xf32>,
    } else {
    }
    return
  }
  func.func @transform_0(%arg0: i32, %arg1: i32) -> (i32, i32) {
    %c0_i32 = arith.constant 0 : i32
    return %arg0, %arg1 : i32, i32
  }
  func.func @transform_1(%arg0: i32, %arg1: i32) -> (i32, i32) {
    %c0_i32 = arith.constant 0 : i32
    %c0_i32_0 = arith.constant 0 : i32
    return %arg1, %c0_i32 : i32, i32
  }
  func.func @transform_2(%arg0: i32, %arg1: i32) -> (i32, i32) {
    %c0_i32 = arith.constant 0 : i32
    %c0_i32_0 = arith.constant 0 : i32
    return %arg0, %c0_i32 : i32, i32
  }
  func.func @transform_3(%arg0: i32, %arg1: i32) -> (i32, i32) {
    %c0_i32 = arith.constant 0 : i32
    %c0_i32_0 = arith.constant 0 : i32
    %c0_i32_1 = arith.constant 0 : i32
    return %c0_i32, %c0_i32_0 : i32, i32
  }
  func.func @transform_4(%arg0: i32, %arg1: i32) -> (i32, i32) {
    %c0_i32 = arith.constant 0 : i32
    %c0_i32_0 = arith.constant 0 : i32
    return %arg0, %c0_i32 : i32, i32
  }
}

module attributes {stable_mosaic.version = 11 : i64} {
  func.func @_disc_kernel(%arg0: i32, %arg1: memref<8x256xbf16, #tpu.memory_space<vmem>>, %arg2: memref<256x256xf32, #tpu.memory_space<vmem>>, %arg3: memref<1xf32, #tpu.memory_space<smem>>, %arg4: memref<8x256xf32, #tpu.memory_space<vmem>>) attributes {dimension_semantics = [#tpu.dimension_semantics<parallel>], iteration_bounds = array<i64: 1>, scalar_prefetch = 0 : i64, scratch_operands = 0 : i64, tpu.core_type = #tpu.core_type<tc>, window_params = [{pipeline_mode = #tpu.pipeline_mode<synchronous>, transform_indices = @transform_0, window_bounds = array<i64: 8, 256>}, {transform_indices = @transform_1, window_bounds = array<i64: 256, 256>}, {transform_indices = @transform_2, window_bounds = array<i64: 1>}, {transform_indices = @transform_3, window_bounds = array<i64: 8, 256>}]} {
    %c0 = arith.constant 0 : index
    %c0_0 = arith.constant 0 : index
    %0 = vector.load %arg1[%c0, %c0_0] : memref<8x256xbf16, #tpu.memory_space<vmem>>, vector<8x256xbf16>
    %c0_1 = arith.constant 0 : index
    %c0_2 = arith.constant 0 : index
    %1 = vector.load %arg2[%c0_1, %c0_2] : memref<256x256xf32, #tpu.memory_space<vmem>>, vector<256x256xf32>
    %2 = arith.truncf %1 : vector<256x256xf32> to vector<256x256xbf16>
    %cst = arith.constant dense<0.000000e+00> : vector<8x256xf32>
    %3 = tpu.matmul %0, %2, %cst {dimension_numbers = #tpu.dot_dimension_numbers<[1], [1], [0], [0], [0, 0, 1, 0], [], []>} : vector<8x256xbf16>, vector<256x256xbf16>, vector<8x256xf32> -> vector<8x256xf32>
    %c0_3 = arith.constant 0 : index
    %4 = memref.load %arg3[%c0_3] : memref<1xf32, #tpu.memory_space<smem>>
    %5 = vector.broadcast %4 : f32 to vector<8x256xf32>
    %6 = arith.addf %3, %5 : vector<8x256xf32>
    %c0_4 = arith.constant 0 : index
    %c0_5 = arith.constant 0 : index
    %7 = vector.load %arg4[%c0_4, %c0_5] : memref<8x256xf32, #tpu.memory_space<vmem>>, vector<8x256xf32>
    tpu.vector_store %arg4[%c0_4, %c0_5], %6 {strides = array<i32>} : memref<8x256xf32, #tpu.memory_space<vmem>>, vector<8x256xf32>,
    return
  }
  func.func @transform_0(%arg0: i32) -> (i32, i32) {
    %c0_i32 = arith.constant 0 : i32
    %c0_i32_0 = arith.constant 0 : i32
    %c0_i32_1 = arith.constant 0 : i32
    return %c0_i32, %c0_i32_0 : i32, i32
  }
  func.func @transform_1(%arg0: i32) -> (i32, i32) {
    %c0_i32 = arith.constant 0 : i32
    %c0_i32_0 = arith.constant 0 : i32
    return %arg0, %c0_i32 : i32, i32
  }
  func.func @transform_2(%arg0: i32) -> i32 {
    %c0_i32 = arith.constant 0 : i32
    %c0_i32_0 = arith.constant 0 : i32
    return %c0_i32 : i32
  }
  func.func @transform_3(%arg0: i32) -> (i32, i32) {
    %c0_i32 = arith.constant 0 : i32
    %c0_i32_0 = arith.constant 0 : i32
    return %c0_i32, %arg0 : i32, i32
  }
}

</mosaic_0001>

<llo_original>
// kernel: dgi_forward_padded.5
$region0: #{dgi_forward_padded.5}
  #allocation0 [shape = 'u32[]', space=smem, size = 0x4, offset = 0x4, fixed_abs, tag = 'smem constant byte address 0x4 - core index']
  #allocation1 [shape = 'u32[144,128]{1,0:T(1,128)}', space=vmem, size = 0x12000, scoped, tag = 'internal scratch']
  #allocation2 [shape = 'f32[1]{0:T(128)S(6)}', space=smem, size = 0x200, scoped, tag = 'scoped memory for dgi_forward_padded.5']
  %s0 = inlined_call_operand.vmem [shape: bf16[8,256], index: 0, kind: input, shape index: {}]
  %s1 = inlined_call_operand.vmem [shape: f32[256,256], index: 1, kind: input, shape index: {}]
  %s2 = inlined_call_operand.<no memory space> [shape: f32[1], index: 2, kind: input, shape index: {}]
  %s3 = inlined_call_operand.hbm [shape: f32[8,256], index: 3, kind: output, shape index: {}]
  %s4 = sld [smem:[#allocation0]]
  $region22: #{dgi_forward_padded.5} parent=0
    _
  %s6 = ssub.s32 1, %s4
  %s7 = scalar_select 0, %s6, %s4
  %8 = sst [smem:[#allocation2]] %s2
  $region1: #{dgi_forward_padded.5} parent=0
    #allocation3 [shape = 'u8[8192]{0}', space=vmem, size = 0x2000, scoped, tag = 'output window, operand 0, single buffered']
    #allocation4 [shape = 's32[1]{0}', space=sflag, size = 0x4, scoped, tag = 'scoped memory for dgi_forward_padded.5']
    %9 = vsyncpa [#allocation4], 0
    // Predicated region
    $region2: #{dgi_forward_padded.5} parent=1 // pred_check
      _
    $region3: #{dgi_forward_padded.5} parent=1 // pred_check_branch
      %11 = sbr.rel (0) target = $region5
    $region4: #{dgi_forward_padded.5} parent=1 // pred_region
      _
    $region5: #{dgi_forward_padded.5} parent=1 // pred_fallthru
      _
    // Predicated region
    $region6: #{dgi_forward_padded.5} parent=1 // pred_check
      _
    $region7: #{dgi_forward_padded.5} parent=1 // pred_check_branch
      %13 = sbr.rel (0) target = $region9
    $region8: #{dgi_forward_padded.5} parent=1 // pred_region
      _
    $region9: #{dgi_forward_padded.5} parent=1 // pred_fallthru
      _
    // Predicated region
    $region10: #{dgi_forward_padded.5} parent=1 // pred_check
      _
    $region11: #{dgi_forward_padded.5} parent=1 // pred_check_branch
      %15 = sbr.rel (0) target = $region13
    $region12: #{dgi_forward_padded.5} parent=1 // pred_region
      _
    $region13: #{dgi_forward_padded.5} parent=1 // pred_fallthru
      _
    %v16 = vld [vmem:[%s0] sm:$0xff]
    %v17 = vld [vmem:[%s1] sm:$0xff]
    %v18 = vld [vmem:[%s1 + $0x8] sm:$0xff]
    %v19 = vld [vmem:[%s1 + $0x10] sm:$0xff]
    %v20 = vld [vmem:[%s1 + $0x18] sm:$0xff]
    %v21 = vld [vmem:[%s1 + $0x20] sm:$0xff]
    %v22 = vld [vmem:[%s1 + $0x28] sm:$0xff]
    %v23 = vld [vmem:[%s1 + $0x30] sm:$0xff]
    %v24 = vld [vmem:[%s1 + $0x38] sm:$0xff]
    %v25 = vld [vmem:[%s1 + $0x40] sm:$0xff]
    %v26 = vld [vmem:[%s1 + $0x48] sm:$0xff]
    %v27 = vld [vmem:[%s1 + $0x50] sm:$0xff]
    %v28 = vld [vmem:[%s1 + $0x58] sm:$0xff]
    %v29 = vld [vmem:[%s1 + $0x60] sm:$0xff]
    %v30 = vld [vmem:[%s1 + $0x68] sm:$0xff]
    %v31 = vld [vmem:[%s1 + $0x70] sm:$0xff]
    %v32 = vld [vmem:[%s1 + $0x78] sm:$0xff]
    %v33 = vld [vmem:[%s1 + $0x80] sm:$0xff]
    %v34 = vld [vmem:[%s1 + $0x88] sm:$0xff]
    %v35 = vld [vmem:[%s1 + $0x90] sm:$0xff]
    %v36 = vld [vmem:[%s1 + $0x98] sm:$0xff]
    %v37 = vld [vmem:[%s1 + $0xa0] sm:$0xff]
    %v38 = vld [vmem:[%s1 + $0xa8] sm:$0xff]
    %v39 = vld [vmem:[%s1 + $0xb0] sm:$0xff]
    %v40 = vld [vmem:[%s1 + $0xb8] sm:$0xff]
    %v41 = vld [vmem:[%s1 + $0xc0] sm:$0xff]
    %v42 = vld [vmem:[%s1 + $0xc8] sm:$0xff]
    %v43 = vld [vmem:[%s1 + $0xd0] sm:$0xff]
    %v44 = vld [vmem:[%s1 + $0xd8] sm:$0xff]
    %v45 = vld [vmem:[%s1 + $0xe0] sm:$0xff]
    %v46 = vld [vmem:[%s1 + $0xe8] sm:$0xff]
    %v47 = vld [vmem:[%s1 + $0xf0] sm:$0xff]
    %v48 = vld [vmem:[%s1 + $0xf8] sm:$0xff]
    %v49 = vld [vmem:[%s1 + $0x100] sm:$0xff]
    %v50 = vld [vmem:[%s1 + $0x108] sm:$0xff]
    %v51 = vld [vmem:[%s1 + $0x110] sm:$0xff]
    %v52 = vld [vmem:[%s1 + $0x118] sm:$0xff]
    %v53 = vld [vmem:[%s1 + $0x120] sm:$0xff]
    %v54 = vld [vmem:[%s1 + $0x128] sm:$0xff]
    %v55 = vld [vmem:[%s1 + $0x130] sm:$0xff]
    %v56 = vld [vmem:[%s1 + $0x138] sm:$0xff]
    %v57 = vld [vmem:[%s1 + $0x140] sm:$0xff]
    %v58 = vld [vmem:[%s1 + $0x148] sm:$0xff]
    %v59 = vld [vmem:[%s1 + $0x150] sm:$0xff]
    %v60 = vld [vmem:[%s1 + $0x158] sm:$0xff]
    %v61 = vld [vmem:[%s1 + $0x160] sm:$0xff]
    %v62 = vld [vmem:[%s1 + $0x168] sm:$0xff]
    %v63 = vld [vmem:[%s1 + $0x170] sm:$0xff]
    %v64 = vld [vmem:[%s1 + $0x178] sm:$0xff]
    %v65 = vld [vmem:[%s1 + $0x180] sm:$0xff]
    %v66 = vld [vmem:[%s1 + $0x188] sm:$0xff]
    %v67 = vld [vmem:[%s1 + $0x190] sm:$0xff]
    %v68 = vld [vmem:[%s1 + $0x198] sm:$0xff]
    %v69 = vld [vmem:[%s1 + $0x1a0] sm:$0xff]
    %v70 = vld [vmem:[%s1 + $0x1a8] sm:$0xff]
    %v71 = vld [vmem:[%s1 + $0x1b0] sm:$0xff]
    %v72 = vld [vmem:[%s1 + $0x1b8] sm:$0xff]
    %v73 = vld [vmem:[%s1 + $0x1c0] sm:$0xff]
    %v74 = vld [vmem:[%s1 + $0x1c8] sm:$0xff]
    %v75 = vld [vmem:[%s1 + $0x1d0] sm:$0xff]
    %v76 = vld [vmem:[%s1 + $0x1d8] sm:$0xff]
    %v77 = vld [vmem:[%s1 + $0x1e0] sm:$0xff]
    %v78 = vld [vmem:[%s1 + $0x1e8] sm:$0xff]
    %v79 = vld [vmem:[%s1 + $0x1f0] sm:$0xff]
    %v80 = vld [vmem:[%s1 + $0x1f8] sm:$0xff]
    %v81 = vpack.c.bf16 %v19, %v17
    %v82 = vpack.c.bf16 %v20, %v18
    %v83 = vpack.c.bf16 %v23, %v21
    %v84 = vpack.c.bf16 %v24, %v22
    %v85 = vpack.c.bf16 %v27, %v25
    %v86 = vpack.c.bf16 %v28, %v26
    %v87 = vpack.c.bf16 %v31, %v29
    %v88 = vpack.c.bf16 %v32, %v30
    %v89 = vpack.c.bf16 %v35, %v33
    %v90 = vpack.c.bf16 %v36, %v34
    %v91 = vpack.c.bf16 %v39, %v37
    %v92 = vpack.c.bf16 %v40, %v38
    %v93 = vpack.c.bf16 %v43, %v41
    %v94 = vpack.c.bf16 %v44, %v42
    %v95 = vpack.c.bf16 %v47, %v45
    %v96 = vpack.c.bf16 %v48, %v46
    %v97 = vpack.c.bf16 %v51, %v49
    %v98 = vpack.c.bf16 %v52, %v50
    %v99 = vpack.c.bf16 %v55, %v53
    %v100 = vpack.c.bf16 %v56, %v54
    %v101 = vpack.c.bf16 %v59, %v57
    %v102 = vpack.c.bf16 %v60, %v58
    %v103 = vpack.c.bf16 %v63, %v61
    %v104 = vpack.c.bf16 %v64, %v62
    %v105 = vpack.c.bf16 %v67, %v65
    %v106 = vpack.c.bf16 %v68, %v66
    %v107 = vpack.c.bf16 %v71, %v69
    %v108 = vpack.c.bf16 %v72, %v70
    %v109 = vpack.c.bf16 %v75, %v73
    %v110 = vpack.c.bf16 %v76, %v74
    %v111 = vpack.c.bf16 %v79, %v77
    %v112 = vpack.c.bf16 %v80, %v78
    %s113 = sld [smem:[#allocation2]]
    %v114 = vstv %s113
    %v116 = vunpack.c.l.b16 %v16
    %v117 = vunpack.c.h.b16 %v16
    %v118 = vpack.c.b16 %v116, %v116
    %v119 = vpack.c.b16 %v117, %v117
    %122 = vmatprep.subr.bf16.mxu0 %v82
    %123 = vmatpush1.bf16.xpose.msra.mxu0 %v81
    %124 = vmatprep.subr.bf16.mxu0 %v84
    %125 = vmatpush1.bf16.xpose.msra.mxu0 %v83
    %126 = vmatprep.subr.bf16.mxu0 %v86
    %127 = vmatpush1.bf16.xpose.msra.mxu0 %v85
    %128 = vmatprep.subr.bf16.mxu0 %v88
    %129 = vmatpush1.bf16.xpose.msra.mxu0 %v87
    %130 = vmatprep.subr.bf16.mxu0 %v90
    %131 = vmatpush1.bf16.xpose.msra.mxu0 %v89
    %132 = vmatprep.subr.bf16.mxu0 %v92
    %133 = vmatpush1.bf16.xpose.msra.mxu0 %v91
    %134 = vmatprep.subr.bf16.mxu0 %v94
    %135 = vmatpush1.bf16.xpose.msra.mxu0 %v93
    %136 = vmatprep.subr.bf16.mxu0 %v96
    %137 = vmatpush1.bf16.xpose.msra.mxu0 %v95
    %138 = vmatprep.subr.bf16.mxu0 %v98
    %139 = vmatpush1.bf16.xpose.msra.mxu0 %v97
    %140 = vmatprep.subr.bf16.mxu0 %v100
    %141 = vmatpush1.bf16.xpose.msra.mxu0 %v99
    %142 = vmatprep.subr.bf16.mxu0 %v102
    %143 = vmatpush1.bf16.xpose.msra.mxu0 %v101
    %144 = vmatprep.subr.bf16.mxu0 %v104
    %145 = vmatpush1.bf16.xpose.msra.mxu0 %v103
    %146 = vmatprep.subr.bf16.mxu0 %v106
    %147 = vmatpush1.bf16.xpose.msra.mxu0 %v105
    %148 = vmatprep.subr.bf16.mxu0 %v108
    %149 = vmatpush1.bf16.xpose.msra.mxu0 %v107
    %150 = vmatprep.subr.bf16.mxu0 %v110
    %151 = vmatpush1.bf16.xpose.msra.mxu0 %v109
    %152 = vmatprep.subr.bf16.mxu0 %v112
    %153 = vmatpush1.bf16.xpose.msra.mxu0 %v111
    %154 = vmatprep.mubr.bf16.mxu0 %v119
    %155 = vmatmul.mubr.bf16.gmra.mrb[0].mxu0 %v118
    %v156 = vpop.f32.mrb[0].mxu0
    %v157 = vadd.f32 %v114, %v156
    %v158 = vpop.f32.mrb[0].mxu0
    %v159 = vadd.f32 %v114, %v158
    %v160 = vpop.f32.mrb[0].mxu0
    %v161 = vpop.f32.mrb[0].mxu0
    %162 = vdwg.mxu0
    %163 = vst [vmem:[#allocation3] sm:$0xff] %v157
    %164 = vst [vmem:[#allocation3 + $0x8] sm:$0xff] %v159
    // Predicated region
    $region14: #{dgi_forward_padded.5} parent=1 // pred_check
      _
    $region15: #{dgi_forward_padded.5} parent=1 // pred_check_branch
      %166 = sbr.rel (0) target = $region17
    $region16: #{dgi_forward_padded.5} parent=1 // pred_region
      %s168 = ssub.s32 256, 256
      %169 = vsyncadd [#allocation4], %s168
      %s171 = sshll.u32 [#allocation3], 4
      %s172 = int_to_ptr.vmem [resolvable:$true] %s171
      %174 = dma.vmem_to_hbm [thread:$0]  %s172, 256, %s3, [#allocation4]
    $region17: #{dgi_forward_padded.5} parent=1 // pred_fallthru
      _
    // Predicated region
    $region18: #{dgi_forward_padded.5} parent=1 // pred_check
      _
    $region19: #{dgi_forward_padded.5} parent=1 // pred_check_branch
      %176 = sbr.rel (0) target = $region21
    $region20: #{dgi_forward_padded.5} parent=1 // pred_region
      %177 = dma.done [#allocation4], 256
    $region21: #{dgi_forward_padded.5} parent=1 // pred_fallthru
      _
    %178 = vsyncpa [#allocation4], 1

// kernel: dgi_forward_padded.4
$region0: #{dgi_forward_padded.4}
  #allocation0 [shape = 'u32[]', space=smem, size = 0x4, offset = 0x4, fixed_abs, tag = 'smem constant byte address 0x4 - core index']
  #allocation1 [shape = 'u32[144,128]{1,0:T(1,128)}', space=vmem, size = 0x12000, scoped, tag = 'internal scratch']
  #allocation2 [shape = 'f32[256,384]{1,0:T(8,128)}', space=vmem, size = 0x60000, scoped, tag = 'scratch operand']
  %s0 = inlined_call_operand.vmem [shape: bf16[256,256], index: 0, kind: input, shape index: {}]
  %s1 = inlined_call_operand.vmem [shape: bf16[256,384], index: 1, kind: input, shape index: {}]
  %s2 = inlined_call_operand.vmem [shape: f32[256,384], index: 2, kind: input, shape index: {}]
  %s3 = inlined_call_operand.vmem [shape: f32[1,128], index: 3, kind: input, shape index: {}]
  %s4 = inlined_call_operand.vmem [shape: f32[256,256], index: 4, kind: output, shape index: {}]
  %s5 = sld [smem:[#allocation0]]
  $region34: #{dgi_forward_padded.4} parent=0
    _
  %s7 = ssub.s32 1, %s5
  %s8 = scalar_select 0, %s7, %s5
  // Predicated region
  $region2: #{dgi_forward_padded.4} parent=0 // pred_check
    _
  $region3: #{dgi_forward_padded.4} parent=0 // pred_check_branch
    %10 = sbr.rel (0) target = $region5
  $region4: #{dgi_forward_padded.4} parent=0 // pred_region
    _
  $region5: #{dgi_forward_padded.4} parent=0 // pred_fallthru
    _
  // Predicated region
  $region6: #{dgi_forward_padded.4} parent=0 // pred_check
    _
  $region7: #{dgi_forward_padded.4} parent=0 // pred_check_branch
    %12 = sbr.rel (0) target = $region9
  $region8: #{dgi_forward_padded.4} parent=0 // pred_region
    _
  $region9: #{dgi_forward_padded.4} parent=0 // pred_fallthru
    _
  // Predicated region
  $region10: #{dgi_forward_padded.4} parent=0 // pred_check
    _
  $region11: #{dgi_forward_padded.4} parent=0 // pred_check_branch
    %14 = sbr.rel (0) target = $region13
  $region12: #{dgi_forward_padded.4} parent=0 // pred_region
    _
  $region13: #{dgi_forward_padded.4} parent=0 // pred_fallthru
    _
  // Predicated region
  $region14: #{dgi_forward_padded.4} parent=0 // pred_check
    _
  $region15: #{dgi_forward_padded.4} parent=0 // pred_check_branch
    %16 = sbr.rel (0) target = $region17
  $region16: #{dgi_forward_padded.4} parent=0 // pred_region
    _
  $region17: #{dgi_forward_padded.4} parent=0 // pred_fallthru
    _
  %p18 = scmp.eq.s32.totalorder 0, 0
  // Predicated region
  $region18: #{dgi_forward_padded.4} parent=0 // pred_check
    %p19 = pneg %p18
  $region19: #{dgi_forward_padded.4} parent=0 // pred_check_branch
    %21 = sbr.rel (%p19) target = $region21
  $region20: #{dgi_forward_padded.4} parent=0 // pred_region
    %22 = vst [vmem:[#allocation2] sm:$0xff] 0.0
    %23 = vst [vmem:[#allocation2 + $0x8] sm:$0xff] 0.0
    %24 = vst [vmem:[#allocation2 + $0x10] sm:$0xff] 0.0
    %25 = vst [vmem:[#allocation2 + $0x18] sm:$0xff] 0.0
    %26 = vst [vmem:[#allocation2 + $0x20] sm:$0xff] 0.0
    %27 = vst [vmem:[#allocation2 + $0x28] sm:$0xff] 0.0
    %28 = vst [vmem:[#allocation2 + $0x30] sm:$0xff] 0.0
    %29 = vst [vmem:[#allocation2 + $0x38] sm:$0xff] 0.0
    %30 = vst [vmem:[#allocation2 + $0x40] sm:$0xff] 0.0
    %31 = vst [vmem:[#allocation2 + $0x48] sm:$0xff] 0.0
    %32 = vst [vmem:[#allocation2 + $0x50] sm:$0xff] 0.0
    %33 = vst [vmem:[#allocation2 + $0x58] sm:$0xff] 0.0
    %34 = vst [vmem:[#allocation2 + $0x60] sm:$0xff] 0.0
    %35 = vst [vmem:[#allocation2 + $0x68] sm:$0xff] 0.0
    %36 = vst [vmem:[#allocation2 + $0x70] sm:$0xff] 0.0
    %37 = vst [vmem:[#allocation2 + $0x78] sm:$0xff] 0.0
    %38 = vst [vmem:[#allocation2 + $0x80] sm:$0xff] 0.0
    %39 = vst [vmem:[#allocation2 + $0x88] sm:$0xff] 0.0
    %40 = vst [vmem:[#allocation2 + $0x90] sm:$0xff] 0.0
    %41 = vst [vmem:[#allocation2 + $0x98] sm:$0xff] 0.0
    %42 = vst [vmem:[#allocation2 + $0xa0] sm:$0xff] 0.0
    %43 = vst [vmem:[#allocation2 + $0xa8] sm:$0xff] 0.0
    %44 = vst [vmem:[#allocation2 + $0xb0] sm:$0xff] 0.0
    %45 = vst [vmem:[#allocation2 + $0xb8] sm:$0xff] 0.0
    %46 = vst [vmem:[#allocation2 + $0xc0] sm:$0xff] 0.0
    %47 = vst [vmem:[#allocation2 + $0xc8] sm:$0xff] 0.0
    %48 = vst [vmem:[#allocation2 + $0xd0] sm:$0xff] 0.0
    %49 = vst [vmem:[#allocation2 + $0xd8] sm:$0xff] 0.0
    %50 = vst [vmem:[#allocation2 + $0xe0] sm:$0xff] 0.0
    %51 = vst [vmem:[#allocation2 + $0xe8] sm:$0xff] 0.0
    %52 = vst [vmem:[#allocation2 + $0xf0] sm:$0xff] 0.0
    %53 = vst [vmem:[#allocation2 + $0xf8] sm:$0xff] 0.0
    %54 = vst [vmem:[#allocation2 + $0x100] sm:$0xff] 0.0
    %55 = vst [vmem:[#allocation2 + $0x108] sm:$0xff] 0.0
    %56 = vst [vmem:[#allocation2 + $0x110] sm:$0xff] 0.0
    %57 = vst [vmem:[#allocation2 + $0x118] sm:$0xff] 0.0
    %58 = vst [vmem:[#allocation2 + $0x120] sm:$0xff] 0.0
    %59 = vst [vmem:[#allocation2 + $0x128] sm:$0xff] 0.0
    %60 = vst [vmem:[#allocation2 + $0x130] sm:$0xff] 0.0
    %61 = vst [vmem:[#allocation2 + $0x138] sm:$0xff] 0.0
    %62 = vst [vmem:[#allocation2 + $0x140] sm:$0xff] 0.0
    %63 = vst [vmem:[#allocation2 + $0x148] sm:$0xff] 0.0
    %64 = vst [vmem:[#allocation2 + $0x150] sm:$0xff] 0.0
    %65 = vst [vmem:[#allocation2 + $0x158] sm:$0xff] 0.0
    %66 = vst [vmem:[#allocation2 + $0x160] sm:$0xff] 0.0
    %67 = vst [vmem:[#allocation2 + $0x168] sm:$0xff] 0.0
    %68 = vst [vmem:[#allocation2 + $0x170] sm:$0xff] 0.0
    %69 = vst [vmem:[#allocation2 + $0x178] sm:$0xff] 0.0
    %70 = vst [vmem:[#allocation2 + $0x180] sm:$0xff] 0.0
    %71 = vst [vmem:[#allocation2 + $0x188] sm:$0xff] 0.0
    %72 = vst [vmem:[#allocation2 + $0x190] sm:$0xff] 0.0
    %73 = vst [vmem:[#allocation2 + $0x198] sm:$0xff] 0.0
    %74 = vst [vmem:[#allocation2 + $0x1a0] sm:$0xff] 0.0
    %75 = vst [vmem:[#allocation2 + $0x1a8] sm:$0xff] 0.0
    %76 = vst [vmem:[#allocation2 + $0x1b0] sm:$0xff] 0.0
    %77 = vst [vmem:[#allocation2 + $0x1b8] sm:$0xff] 0.0
    %78 = vst [vmem:[#allocation2 + $0x1c0] sm:$0xff] 0.0
    %79 = vst [vmem:[#allocation2 + $0x1c8] sm:$0xff] 0.0
    %80 = vst [vmem:[#allocation2 + $0x1d0] sm:$0xff] 0.0
    %81 = vst [vmem:[#allocation2 + $0x1d8] sm:$0xff] 0.0
    %82 = vst [vmem:[#allocation2 + $0x1e0] sm:$0xff] 0.0
    %83 = vst [vmem:[#allocation2 + $0x1e8] sm:$0xff] 0.0
    %84 = vst [vmem:[#allocation2 + $0x1f0] sm:$0xff] 0.0
    %85 = vst [vmem:[#allocation2 + $0x1f8] sm:$0xff] 0.0
    %86 = vst [vmem:[#allocation2 + $0x200] sm:$0xff] 0.0
    %87 = vst [vmem:[#allocation2 + $0x208] sm:$0xff] 0.0
    %88 = vst [vmem:[#allocation2 + $0x210] sm:$0xff] 0.0
    %89 = vst [vmem:[#allocation2 + $0x218] sm:$0xff] 0.0
    %90 = vst [vmem:[#allocation2 + $0x220] sm:$0xff] 0.0
    %91 = vst [vmem:[#allocation2 + $0x228] sm:$0xff] 0.0
    %92 = vst [vmem:[#allocation2 + $0x230] sm:$0xff] 0.0
    %93 = vst [vmem:[#allocation2 + $0x238] sm:$0xff] 0.0
    %94 = vst [vmem:[#allocation2 + $0x240] sm:$0xff] 0.0
    %95 = vst [vmem:[#allocation2 + $0x248] sm:$0xff] 0.0
    %96 = vst [vmem:[#allocation2 + $0x250] sm:$0xff] 0.0
    %97 = vst [vmem:[#allocation2 + $0x258] sm:$0xff] 0.0
    %98 = vst [vmem:[#allocation2 + $0x260] sm:$0xff] 0.0
    %99 = vst [vmem:[#allocation2 + $0x268] sm:$0xff] 0.0
    %100 = vst [vmem:[#allocation2 + $0x270] sm:$0xff] 0.0
    %101 = vst [vmem:[#allocation2 + $0x278] sm:$0xff] 0.0
    %102 = vst [vmem:[#allocation2 + $0x280] sm:$0xff] 0.0
    %103 = vst [vmem:[#allocation2 + $0x288] sm:$0xff] 0.0
    %104 = vst [vmem:[#allocation2 + $0x290] sm:$0xff] 0.0
    %105 = vst [vmem:[#allocation2 + $0x298] sm:$0xff] 0.0
    %106 = vst [vmem:[#allocation2 + $0x2a0] sm:$0xff] 0.0
    %107 = vst [vmem:[#allocation2 + $0x2a8] sm:$0xff] 0.0
    %108 = vst [vmem:[#allocation2 + $0x2b0] sm:$0xff] 0.0
    %109 = vst [vmem:[#allocation2 + $0x2b8] sm:$0xff] 0.0
    %110 = vst [vmem:[#allocation2 + $0x2c0] sm:$0xff] 0.0
    %111 = vst [vmem:[#allocation2 + $0x2c8] sm:$0xff] 0.0
    %112 = vst [vmem:[#allocation2 + $0x2d0] sm:$0xff] 0.0
    %113 = vst [vmem:[#allocation2 + $0x2d8] sm:$0xff] 0.0
    %114 = vst [vmem:[#allocation2 + $0x2e0] sm:$0xff] 0.0
    %115 = vst [vmem:[#allocation2 + $0x2e8] sm:$0xff] 0.0
    %116 = vst [vmem:[#allocation2 + $0x2f0] sm:$0xff] 0.0
    %117 = vst [vmem:[#allocation2 + $0x2f8] sm:$0xff] 0.0
  $region21: #{dgi_forward_padded.4} parent=0 // pred_fallthru
    _
  %v118 = vld [vmem:[#allocation2] sm:$0xff]
  %v119 = vld [vmem:[#allocation2 + $0x8] sm:$0xff]
  %v120 = vld [vmem:[#allocation2 + $0x10] sm:$0xff]
  %v121 = vld [vmem:[#allocation2 + $0x18] sm:$0xff]
  %v122 = vld [vmem:[#allocation2 + $0x20] sm:$0xff]
  %v123 = vld [vmem:[#allocation2 + $0x28] sm:$0xff]
  %v124 = vld [vmem:[#allocation2 + $0x30] sm:$0xff]
  %v125 = vld [vmem:[#allocation2 + $0x38] sm:$0xff]
  %v126 = vld [vmem:[#allocation2 + $0x40] sm:$0xff]
  %v127 = vld [vmem:[#allocation2 + $0x48] sm:$0xff]
  %v128 = vld [vmem:[#allocation2 + $0x50] sm:$0xff]
  %v129 = vld [vmem:[#allocation2 + $0x58] sm:$0xff]
  %v130 = vld [vmem:[#allocation2 + $0x60] sm:$0xff]
  %v131 = vld [vmem:[#allocation2 + $0x68] sm:$0xff]
  %v132 = vld [vmem:[#allocation2 + $0x70] sm:$0xff]
  %v133 = vld [vmem:[#allocation2 + $0x78] sm:$0xff]
  %v134 = vld [vmem:[#allocation2 + $0x80] sm:$0xff]
  %v135 = vld [vmem:[#allocation2 + $0x88] sm:$0xff]
  %v136 = vld [vmem:[#allocation2 + $0x90] sm:$0xff]
  %v137 = vld [vmem:[#allocation2 + $0x98] sm:$0xff]
  %v138 = vld [vmem:[#allocation2 + $0xa0] sm:$0xff]
  %v139 = vld [vmem:[#allocation2 + $0xa8] sm:$0xff]
  %v140 = vld [vmem:[#allocation2 + $0xb0] sm:$0xff]
  %v141 = vld [vmem:[#allocation2 + $0xb8] sm:$0xff]
  %v142 = vld [vmem:[#allocation2 + $0xc0] sm:$0xff]
  %v143 = vld [vmem:[#allocation2 + $0xc8] sm:$0xff]
  %v144 = vld [vmem:[#allocation2 + $0xd0] sm:$0xff]
  %v145 = vld [vmem:[#allocation2 + $0xd8] sm:$0xff]
  %v146 = vld [vmem:[#allocation2 + $0xe0] sm:$0xff]
  %v147 = vld [vmem:[#allocation2 + $0xe8] sm:$0xff]
  %v148 = vld [vmem:[#allocation2 + $0xf0] sm:$0xff]
  %v149 = vld [vmem:[#allocation2 + $0xf8] sm:$0xff]
  %v150 = vld [vmem:[#allocation2 + $0x100] sm:$0xff]
  %v151 = vld [vmem:[#allocation2 + $0x108] sm:$0xff]
  %v152 = vld [vmem:[#allocation2 + $0x110] sm:$0xff]
  %v153 = vld [vmem:[#allocation2 + $0x118] sm:$0xff]
  %v154 = vld [vmem:[#allocation2 + $0x120] sm:$0xff]
  %v155 = vld [vmem:[#allocation2 + $0x128] sm:$0xff]
  %v156 = vld [vmem:[#allocation2 + $0x130] sm:$0xff]
  %v157 = vld [vmem:[#allocation2 + $0x138] sm:$0xff]
  %v158 = vld [vmem:[#allocation2 + $0x140] sm:$0xff]
  %v159 = vld [vmem:[#allocation2 + $0x148] sm:$0xff]
  %v160 = vld [vmem:[#allocation2 + $0x150] sm:$0xff]
  %v161 = vld [vmem:[#allocation2 + $0x158] sm:$0xff]
  %v162 = vld [vmem:[#allocation2 + $0x160] sm:$0xff]
  %v163 = vld [vmem:[#allocation2 + $0x168] sm:$0xff]
  %v164 = vld [vmem:[#allocation2 + $0x170] sm:$0xff]
  %v165 = vld [vmem:[#allocation2 + $0x178] sm:$0xff]
  %v166 = vld [vmem:[#allocation2 + $0x180] sm:$0xff]
  %v167 = vld [vmem:[#allocation2 + $0x188] sm:$0xff]
  %v168 = vld [vmem:[#allocation2 + $0x190] sm:$0xff]
  %v169 = vld [vmem:[#allocation2 + $0x198] sm:$0xff]
  %v170 = vld [vmem:[#allocation2 + $0x1a0] sm:$0xff]
  %v171 = vld [vmem:[#allocation2 + $0x1a8] sm:$0xff]
  %v172 = vld [vmem:[#allocation2 + $0x1b0] sm:$0xff]
  %v173 = vld [vmem:[#allocation2 + $0x1b8] sm:$0xff]
  %v174 = vld [vmem:[#allocation2 + $0x1c0] sm:$0xff]
  %v175 = vld [vmem:[#allocation2 + $0x1c8] sm:$0xff]
  %v176 = vld [vmem:[#allocation2 + $0x1d0] sm:$0xff]
  %v177 = vld [vmem:[#allocation2 + $0x1d8] sm:$0xff]
  %v178 = vld [vmem:[#allocation2 + $0x1e0] sm:$0xff]
  %v179 = vld [vmem:[#allocation2 + $0x1e8] sm:$0xff]
  %v180 = vld [vmem:[#allocation2 + $0x1f0] sm:$0xff]
  %v181 = vld [vmem:[#allocation2 + $0x1f8] sm:$0xff]
  %v182 = vld [vmem:[#allocation2 + $0x200] sm:$0xff]
  %v183 = vld [vmem:[#allocation2 + $0x208] sm:$0xff]
  %v184 = vld [vmem:[#allocation2 + $0x210] sm:$0xff]
  %v185 = vld [vmem:[#allocation2 + $0x218] sm:$0xff]
  %v186 = vld [vmem:[#allocation2 + $0x220] sm:$0xff]
  %v187 = vld [vmem:[#allocation2 + $0x228] sm:$0xff]
  %v188 = vld [vmem:[#allocation2 + $0x230] sm:$0xff]
  %v189 = vld [vmem:[#allocation2 + $0x238] sm:$0xff]
  %v190 = vld [vmem:[#allocation2 + $0x240] sm:$0xff]
  %v191 = vld [vmem:[#allocation2 + $0x248] sm:$0xff]
  %v192 = vld [vmem:[#allocation2 + $0x250] sm:$0xff]
  %v193 = vld [vmem:[#allocation2 + $0x258] sm:$0xff]
  %v194 = vld [vmem:[#allocation2 + $0x260] sm:$0xff]
  %v195 = vld [vmem:[#allocation2 + $0x268] sm:$0xff]
  %v196 = vld [vmem:[#allocation2 + $0x270] sm:$0xff]
  %v197 = vld [vmem:[#allocation2 + $0x278] sm:$0xff]
  %v198 = vld [vmem:[#allocation2 + $0x280] sm:$0xff]
  %v199 = vld [vmem:[#allocation2 + $0x288] sm:$0xff]
  %v200 = vld [vmem:[#allocation2 + $0x290] sm:$0xff]
  %v201 = vld [vmem:[#allocation2 + $0x298] sm:$0xff]
  %v202 = vld [vmem:[#allocation2 + $0x2a0] sm:$0xff]
  %v203 = vld [vmem:[#allocation2 + $0x2a8] sm:$0xff]
  %v204 = vld [vmem:[#allocation2 + $0x2b0] sm:$0xff]
  %v205 = vld [vmem:[#allocation2 + $0x2b8] sm:$0xff]
  %v206 = vld [vmem:[#allocation2 + $0x2c0] sm:$0xff]
  %v207 = vld [vmem:[#allocation2 + $0x2c8] sm:$0xff]
  %v208 = vld [vmem:[#allocation2 + $0x2d0] sm:$0xff]
  %v209 = vld [vmem:[#allocation2 + $0x2d8] sm:$0xff]
  %v210 = vld [vmem:[#allocation2 + $0x2e0] sm:$0xff]
  %v211 = vld [vmem:[#allocation2 + $0x2e8] sm:$0xff]
  %v212 = vld [vmem:[#allocation2 + $0x2f0] sm:$0xff]
  %v213 = vld [vmem:[#allocation2 + $0x2f8] sm:$0xff]
  %v214 = vld [vmem:[%s0] sm:$0xff]
  %v215 = vld [vmem:[%s0 + $0x8] sm:$0xff]
  %v216 = vld [vmem:[%s0 + $0x10] sm:$0xff]
  %v217 = vld [vmem:[%s0 + $0x18] sm:$0xff]
  %v218 = vld [vmem:[%s0 + $0x20] sm:$0xff]
  %v219 = vld [vmem:[%s0 + $0x28] sm:$0xff]
  %v220 = vld [vmem:[%s0 + $0x30] sm:$0xff]
  %v221 = vld [vmem:[%s0 + $0x38] sm:$0xff]
  %v222 = vld [vmem:[%s0 + $0x40] sm:$0xff]
  %v223 = vld [vmem:[%s0 + $0x48] sm:$0xff]
  %v224 = vld [vmem:[%s0 + $0x50] sm:$0xff]
  %v225 = vld [vmem:[%s0 + $0x58] sm:$0xff]
  %v226 = vld [vmem:[%s0 + $0x60] sm:$0xff]
  %v227 = vld [vmem:[%s0 + $0x68] sm:$0xff]
  %v228 = vld [vmem:[%s0 + $0x70] sm:$0xff]
  %v229 = vld [vmem:[%s0 + $0x78] sm:$0xff]
  %v230 = vld [vmem:[%s0 + $0x80] sm:$0xff]
  %v231 = vld [vmem:[%s0 + $0x88] sm:$0xff]
  %v232 = vld [vmem:[%s0 + $0x90] sm:$0xff]
  %v233 = vld [vmem:[%s0 + $0x98] sm:$0xff]
  %v234 = vld [vmem:[%s0 + $0xa0] sm:$0xff]
  %v235 = vld [vmem:[%s0 + $0xa8] sm:$0xff]
  %v236 = vld [vmem:[%s0 + $0xb0] sm:$0xff]
  %v237 = vld [vmem:[%s0 + $0xb8] sm:$0xff]
  %v238 = vld [vmem:[%s0 + $0xc0] sm:$0xff]
  %v239 = vld [vmem:[%s0 + $0xc8] sm:$0xff]
  %v240 = vld [vmem:[%s0 + $0xd0] sm:$0xff]
  %v241 = vld [vmem:[%s0 + $0xd8] sm:$0xff]
  %v242 = vld [vmem:[%s0 + $0xe0] sm:$0xff]
  %v243 = vld [vmem:[%s0 + $0xe8] sm:$0xff]
  %v244 = vld [vmem:[%s0 + $0xf0] sm:$0xff]
  %v245 = vld [vmem:[%s0 + $0xf8] sm:$0xff]
  %v246 = vld [vmem:[%s1] sm:$0xff]
  %v247 = vld [vmem:[%s1 + $0x8] sm:$0xf]
  %v248 = vld [vmem:[%s1 + $0xc] sm:$0xff]
  %v249 = vld [vmem:[%s1 + $0x14] sm:$0xf]
  %v250 = vld [vmem:[%s1 + $0x18] sm:$0xff]
  %v251 = vld [vmem:[%s1 + $0x20] sm:$0xf]
  %v252 = vld [vmem:[%s1 + $0x24] sm:$0xff]
  %v253 = vld [vmem:[%s1 + $0x2c] sm:$0xf]
  %v254 = vld [vmem:[%s1 + $0x30] sm:$0xff]
  %v255 = vld [vmem:[%s1 + $0x38] sm:$0xf]
  %v256 = vld [vmem:[%s1 + $0x3c] sm:$0xff]
  %v257 = vld [vmem:[%s1 + $0x44] sm:$0xf]
  %v258 = vld [vmem:[%s1 + $0x48] sm:$0xff]
  %v259 = vld [vmem:[%s1 + $0x50] sm:$0xf]
  %v260 = vld [vmem:[%s1 + $0x54] sm:$0xff]
  %v261 = vld [vmem:[%s1 + $0x5c] sm:$0xf]
  %v262 = vld [vmem:[%s1 + $0x60] sm:$0xff]
  %v263 = vld [vmem:[%s1 + $0x68] sm:$0xf]
  %v264 = vld [vmem:[%s1 + $0x6c] sm:$0xff]
  %v265 = vld [vmem:[%s1 + $0x74] sm:$0xf]
  %v266 = vld [vmem:[%s1 + $0x78] sm:$0xff]
  %v267 = vld [vmem:[%s1 + $0x80] sm:$0xf]
  %v268 = vld [vmem:[%s1 + $0x84] sm:$0xff]
  %v269 = vld [vmem:[%s1 + $0x8c] sm:$0xf]
  %v270 = vld [vmem:[%s1 + $0x90] sm:$0xff]
  %v271 = vld [vmem:[%s1 + $0x98] sm:$0xf]
  %v272 = vld [vmem:[%s1 + $0x9c] sm:$0xff]
  %v273 = vld [vmem:[%s1 + $0xa4] sm:$0xf]
  %v274 = vld [vmem:[%s1 + $0xa8] sm:$0xff]
  %v275 = vld [vmem:[%s1 + $0xb0] sm:$0xf]
  %v276 = vld [vmem:[%s1 + $0xb4] sm:$0xff]
  %v277 = vld [vmem:[%s1 + $0xbc] sm:$0xf]
  %v278 = vld [vmem:[%s1 + $0xc0] sm:$0xff]
  %v279 = vld [vmem:[%s1 + $0xc8] sm:$0xf]
  %v280 = vld [vmem:[%s1 + $0xcc] sm:$0xff]
  %v281 = vld [vmem:[%s1 + $0xd4] sm:$0xf]
  %v282 = vld [vmem:[%s1 + $0xd8] sm:$0xff]
  %v283 = vld [vmem:[%s1 + $0xe0] sm:$0xf]
  %v284 = vld [vmem:[%s1 + $0xe4] sm:$0xff]
  %v285 = vld [vmem:[%s1 + $0xec] sm:$0xf]
  %v286 = vld [vmem:[%s1 + $0xf0] sm:$0xff]
  %v287 = vld [vmem:[%s1 + $0xf8] sm:$0xf]
  %v288 = vld [vmem:[%s1 + $0xfc] sm:$0xff]
  %v289 = vld [vmem:[%s1 + $0x104] sm:$0xf]
  %v290 = vld [vmem:[%s1 + $0x108] sm:$0xff]
  %v291 = vld [vmem:[%s1 + $0x110] sm:$0xf]
  %v292 = vld [vmem:[%s1 + $0x114] sm:$0xff]
  %v293 = vld [vmem:[%s1 + $0x11c] sm:$0xf]
  %v294 = vld [vmem:[%s1 + $0x120] sm:$0xff]
  %v295 = vld [vmem:[%s1 + $0x128] sm:$0xf]
  %v296 = vld [vmem:[%s1 + $0x12c] sm:$0xff]
  %v297 = vld [vmem:[%s1 + $0x134] sm:$0xf]
  %v298 = vld [vmem:[%s1 + $0x138] sm:$0xff]
  %v299 = vld [vmem:[%s1 + $0x140] sm:$0xf]
  %v300 = vld [vmem:[%s1 + $0x144] sm:$0xff]
  %v301 = vld [vmem:[%s1 + $0x14c] sm:$0xf]
  %v302 = vld [vmem:[%s1 + $0x150] sm:$0xff]
  %v303 = vld [vmem:[%s1 + $0x158] sm:$0xf]
  %v304 = vld [vmem:[%s1 + $0x15c] sm:$0xff]
  %v305 = vld [vmem:[%s1 + $0x164] sm:$0xf]
  %v306 = vld [vmem:[%s1 + $0x168] sm:$0xff]
  %v307 = vld [vmem:[%s1 + $0x170] sm:$0xf]
  %v308 = vld [vmem:[%s1 + $0x174] sm:$0xff]
  %v309 = vld [vmem:[%s1 + $0x17c] sm:$0xf]
  %v342 = vunpack.c.l.b16 %v214
  %v343 = vunpack.c.h.b16 %v214
  %v344 = vunpack.c.l.b16 %v215
  %v345 = vunpack.c.h.b16 %v215
  %v346 = vunpack.c.l.b16 %v216
  %v347 = vunpack.c.h.b16 %v216
  %v348 = vunpack.c.l.b16 %v217
  %v349 = vunpack.c.h.b16 %v217
  %v350 = vunpack.c.l.b16 %v218
  %v351 = vunpack.c.h.b16 %v218
  %v352 = vunpack.c.l.b16 %v219
  %v353 = vunpack.c.h.b16 %v219
  %v354 = vunpack.c.l.b16 %v220
  %v355 = vunpack.c.h.b16 %v220
  %v356 = vunpack.c.l.b16 %v221
  %v357 = vunpack.c.h.b16 %v221
  %v358 = vunpack.c.l.b16 %v222
  %v359 = vunpack.c.h.b16 %v222
  %v360 = vunpack.c.l.b16 %v223
  %v361 = vunpack.c.h.b16 %v223
  %v362 = vunpack.c.l.b16 %v224
  %v363 = vunpack.c.h.b16 %v224
  %v364 = vunpack.c.l.b16 %v225
  %v365 = vunpack.c.h.b16 %v225
  %v366 = vunpack.c.l.b16 %v226
  %v367 = vunpack.c.h.b16 %v226
  %v368 = vunpack.c.l.b16 %v227
  %v369 = vunpack.c.h.b16 %v227
  %v370 = vunpack.c.l.b16 %v228
  %v371 = vunpack.c.h.b16 %v228
  %v372 = vunpack.c.l.b16 %v229
  %v373 = vunpack.c.h.b16 %v229
  %v374 = vunpack.c.l.b16 %v230
  %v375 = vunpack.c.h.b16 %v230
  %v376 = vunpack.c.l.b16 %v231
  %v377 = vunpack.c.h.b16 %v231
  %v378 = vunpack.c.l.b16 %v232
  %v379 = vunpack.c.h.b16 %v232
  %v380 = vunpack.c.l.b16 %v233
  %v381 = vunpack.c.h.b16 %v233
  %v382 = vunpack.c.l.b16 %v234
  %v383 = vunpack.c.h.b16 %v234
  %v384 = vunpack.c.l.b16 %v235
  %v385 = vunpack.c.h.b16 %v235
  %v386 = vunpack.c.l.b16 %v236
  %v387 = vunpack.c.h.b16 %v236
  %v388 = vunpack.c.l.b16 %v237
  %v389 = vunpack.c.h.b16 %v237
  %v390 = vunpack.c.l.b16 %v238
  %v391 = vunpack.c.h.b16 %v238
  %v392 = vunpack.c.l.b16 %v239
  %v393 = vunpack.c.h.b16 %v239
  %v394 = vunpack.c.l.b16 %v240
  %v395 = vunpack.c.h.b16 %v240
  %v396 = vunpack.c.l.b16 %v241
  %v397 = vunpack.c.h.b16 %v241
  %v398 = vunpack.c.l.b16 %v242
  %v399 = vunpack.c.h.b16 %v242
  %v400 = vunpack.c.l.b16 %v243
  %v401 = vunpack.c.h.b16 %v243
  %v402 = vunpack.c.l.b16 %v244
  %v403 = vunpack.c.h.b16 %v244
  %v404 = vunpack.c.l.b16 %v245
  %v405 = vunpack.c.h.b16 %v245
  %v406 = vpack.c.b16 %v344, %v342
  %v407 = vpack.c.b16 %v345, %v343
  %v408 = vpack.c.b16 %v348, %v346
  %v409 = vpack.c.b16 %v349, %v347
  %v410 = vpack.c.b16 %v352, %v350
  %v411 = vpack.c.b16 %v353, %v351
  %v412 = vpack.c.b16 %v356, %v354
  %v413 = vpack.c.b16 %v357, %v355
  %v414 = vpack.c.b16 %v360, %v358
  %v415 = vpack.c.b16 %v361, %v359
  %v416 = vpack.c.b16 %v364, %v362
  %v417 = vpack.c.b16 %v365, %v363
  %v418 = vpack.c.b16 %v368, %v366
  %v419 = vpack.c.b16 %v369, %v367
  %v420 = vpack.c.b16 %v372, %v370
  %v421 = vpack.c.b16 %v373, %v371
  %v422 = vpack.c.b16 %v376, %v374
  %v423 = vpack.c.b16 %v377, %v375
  %v424 = vpack.c.b16 %v380, %v378
  %v425 = vpack.c.b16 %v381, %v379
  %v426 = vpack.c.b16 %v384, %v382
  %v427 = vpack.c.b16 %v385, %v383
  %v428 = vpack.c.b16 %v388, %v386
  %v429 = vpack.c.b16 %v389, %v387
  %v430 = vpack.c.b16 %v392, %v390
  %v431 = vpack.c.b16 %v393, %v391
  %v432 = vpack.c.b16 %v396, %v394
  %v433 = vpack.c.b16 %v397, %v395
  %v434 = vpack.c.b16 %v400, %v398
  %v435 = vpack.c.b16 %v401, %v399
  %v436 = vpack.c.b16 %v404, %v402
  %v437 = vpack.c.b16 %v405, %v403
  %v534 = vunpack.c.l.b16 %v246
  %v535 = vunpack.c.h.b16 %v246
  %v536 = vunpack.c.l.b16 %v247
  %v537 = vunpack.c.l.b16 %v248
  %v538 = vunpack.c.h.b16 %v248
  %v539 = vunpack.c.l.b16 %v249
  %v540 = vunpack.c.l.b16 %v250
  %v541 = vunpack.c.h.b16 %v250
  %v542 = vunpack.c.l.b16 %v251
  %v543 = vunpack.c.l.b16 %v252
  %v544 = vunpack.c.h.b16 %v252
  %v545 = vunpack.c.l.b16 %v253
  %v546 = vunpack.c.l.b16 %v254
  %v547 = vunpack.c.h.b16 %v254
  %v548 = vunpack.c.l.b16 %v255
  %v549 = vunpack.c.l.b16 %v256
  %v550 = vunpack.c.h.b16 %v256
  %v551 = vunpack.c.l.b16 %v257
  %v552 = vunpack.c.l.b16 %v258
  %v553 = vunpack.c.h.b16 %v258
  %v554 = vunpack.c.l.b16 %v259
  %v555 = vunpack.c.l.b16 %v260
  %v556 = vunpack.c.h.b16 %v260
  %v557 = vunpack.c.l.b16 %v261
  %v558 = vunpack.c.l.b16 %v262
  %v559 = vunpack.c.h.b16 %v262
  %v560 = vunpack.c.l.b16 %v263
  %v561 = vunpack.c.l.b16 %v264
  %v562 = vunpack.c.h.b16 %v264
  %v563 = vunpack.c.l.b16 %v265
  %v564 = vunpack.c.l.b16 %v266
  %v565 = vunpack.c.h.b16 %v266
  %v566 = vunpack.c.l.b16 %v267
  %v567 = vunpack.c.l.b16 %v268
  %v568 = vunpack.c.h.b16 %v268
  %v569 = vunpack.c.l.b16 %v269
  %v570 = vunpack.c.l.b16 %v270
  %v571 = vunpack.c.h.b16 %v270
  %v572 = vunpack.c.l.b16 %v271
  %v573 = vunpack.c.l.b16 %v272
  %v574 = vunpack.c.h.b16 %v272
  %v575 = vunpack.c.l.b16 %v273
  %v576 = vunpack.c.l.b16 %v274
  %v577 = vunpack.c.h.b16 %v274
  %v578 = vunpack.c.l.b16 %v275
  %v579 = vunpack.c.l.b16 %v276
  %v580 = vunpack.c.h.b16 %v276
  %v581 = vunpack.c.l.b16 %v277
  %v582 = vunpack.c.l.b16 %v278
  %v583 = vunpack.c.h.b16 %v278
  %v584 = vunpack.c.l.b16 %v279
  %v585 = vunpack.c.l.b16 %v280
  %v586 = vunpack.c.h.b16 %v280
  %v587 = vunpack.c.l.b16 %v281
  %v588 = vunpack.c.l.b16 %v282
  %v589 = vunpack.c.h.b16 %v282
  %v590 = vunpack.c.l.b16 %v283
  %v591 = vunpack.c.l.b16 %v284
  %v592 = vunpack.c.h.b16 %v284
  %v593 = vunpack.c.l.b16 %v285
  %v594 = vunpack.c.l.b16 %v286
  %v595 = vunpack.c.h.b16 %v286
  %v596 = vunpack.c.l.b16 %v287
  %v597 = vunpack.c.l.b16 %v288
  %v598 = vunpack.c.h.b16 %v288
  %v599 = vunpack.c.l.b16 %v289
  %v600 = vunpack.c.l.b16 %v290
  %v601 = vunpack.c.h.b16 %v290
  %v602 = vunpack.c.l.b16 %v291
  %v603 = vunpack.c.l.b16 %v292
  %v604 = vunpack.c.h.b16 %v292
  %v605 = vunpack.c.l.b16 %v293
  %v606 = vunpack.c.l.b16 %v294
  %v607 = vunpack.c.h.b16 %v294
  %v608 = vunpack.c.l.b16 %v295
  %v609 = vunpack.c.l.b16 %v296
  %v610 = vunpack.c.h.b16 %v296
  %v611 = vunpack.c.l.b16 %v297
  %v612 = vunpack.c.l.b16 %v298
  %v613 = vunpack.c.h.b16 %v298
  %v614 = vunpack.c.l.b16 %v299
  %v615 = vunpack.c.l.b16 %v300
  %v616 = vunpack.c.h.b16 %v300
  %v617 = vunpack.c.l.b16 %v301
  %v618 = vunpack.c.l.b16 %v302
  %v619 = vunpack.c.h.b16 %v302
  %v620 = vunpack.c.l.b16 %v303
  %v621 = vunpack.c.l.b16 %v304
  %v622 = vunpack.c.h.b16 %v304
  %v623 = vunpack.c.l.b16 %v305
  %v624 = vunpack.c.l.b16 %v306
  %v625 = vunpack.c.h.b16 %v306
  %v626 = vunpack.c.l.b16 %v307
  %v627 = vunpack.c.l.b16 %v308
  %v628 = vunpack.c.h.b16 %v308
  %v629 = vunpack.c.l.b16 %v309
  %v630 = vpack.c.b16 %v537, %v534
  %v631 = vpack.c.b16 %v538, %v535
  %v632 = vpack.c.b16 %v539, %v536
  %v633 = vpack.c.b16 %v543, %v540
  %v634 = vpack.c.b16 %v544, %v541
  %v635 = vpack.c.b16 %v545, %v542
  %v636 = vpack.c.b16 %v549, %v546
  %v637 = vpack.c.b16 %v550, %v547
  %v638 = vpack.c.b16 %v551, %v548
  %v639 = vpack.c.b16 %v555, %v552
  %v640 = vpack.c.b16 %v556, %v553
  %v641 = vpack.c.b16 %v557, %v554
  %v642 = vpack.c.b16 %v561, %v558
  %v643 = vpack.c.b16 %v562, %v559
  %v644 = vpack.c.b16 %v563, %v560
  %v645 = vpack.c.b16 %v567, %v564
  %v646 = vpack.c.b16 %v568, %v565
  %v647 = vpack.c.b16 %v569, %v566
  %v648 = vpack.c.b16 %v573, %v570
  %v649 = vpack.c.b16 %v574, %v571
  %v650 = vpack.c.b16 %v575, %v572
  %v651 = vpack.c.b16 %v579, %v576
  %v652 = vpack.c.b16 %v580, %v577
  %v653 = vpack.c.b16 %v581, %v578
  %v654 = vpack.c.b16 %v585, %v582
  %v655 = vpack.c.b16 %v586, %v583
  %v656 = vpack.c.b16 %v587, %v584
  %v657 = vpack.c.b16 %v591, %v588
  %v658 = vpack.c.b16 %v592, %v589
  %v659 = vpack.c.b16 %v593, %v590
  %v660 = vpack.c.b16 %v597, %v594
  %v661 = vpack.c.b16 %v598, %v595
  %v662 = vpack.c.b16 %v599, %v596
  %v663 = vpack.c.b16 %v603, %v600
  %v664 = vpack.c.b16 %v604, %v601
  %v665 = vpack.c.b16 %v605, %v602
  %v666 = vpack.c.b16 %v609, %v606
  %v667 = vpack.c.b16 %v610, %v607
  %v668 = vpack.c.b16 %v611, %v608
  %v669 = vpack.c.b16 %v615, %v612
  %v670 = vpack.c.b16 %v616, %v613
  %v671 = vpack.c.b16 %v617, %v614
  %v672 = vpack.c.b16 %v621, %v618
  %v673 = vpack.c.b16 %v622, %v619
  %v674 = vpack.c.b16 %v623, %v620
  %v675 = vpack.c.b16 %v627, %v624
  %v676 = vpack.c.b16 %v628, %v625
  %v677 = vpack.c.b16 %v629, %v626
  %726 = vmatprep.subr.bf16.mxu0 %v631
  %727 = vmatpush1.bf16.msra.mxu0 %v630
  %728 = vmatprep.subr.bf16.mxu0 %v634
  %729 = vmatpush1.bf16.msra.mxu0 %v633
  %730 = vmatprep.subr.bf16.mxu0 %v637
  %731 = vmatpush1.bf16.msra.mxu0 %v636
  %732 = vmatprep.subr.bf16.mxu0 %v640
  %733 = vmatpush1.bf16.msra.mxu0 %v639
  %734 = vmatprep.subr.bf16.mxu0 %v643
  %735 = vmatpush1.bf16.msra.mxu0 %v642
  %736 = vmatprep.subr.bf16.mxu0 %v646
  %737 = vmatpush1.bf16.msra.mxu0 %v645
  %738 = vmatprep.subr.bf16.mxu0 %v649
  %739 = vmatpush1.bf16.msra.mxu0 %v648
  %740 = vmatprep.subr.bf16.mxu0 %v652
  %741 = vmatpush1.bf16.msra.mxu0 %v651
  %742 = vmatprep.subr.bf16.mxu0 %v655
  %743 = vmatpush1.bf16.msra.mxu0 %v654
  %744 = vmatprep.subr.bf16.mxu0 %v658
  %745 = vmatpush1.bf16.msra.mxu0 %v657
  %746 = vmatprep.subr.bf16.mxu0 %v661
  %747 = vmatpush1.bf16.msra.mxu0 %v660
  %748 = vmatprep.subr.bf16.mxu0 %v664
  %749 = vmatpush1.bf16.msra.mxu0 %v663
  %750 = vmatprep.subr.bf16.mxu0 %v667
  %751 = vmatpush1.bf16.msra.mxu0 %v666
  %752 = vmatprep.subr.bf16.mxu0 %v670
  %753 = vmatpush1.bf16.msra.mxu0 %v669
  %754 = vmatprep.subr.bf16.mxu0 %v673
  %755 = vmatpush1.bf16.msra.mxu0 %v672
  %756 = vmatprep.subr.bf16.mxu0 %v676
  %757 = vmatpush1.bf16.msra.mxu0 %v675
  %758 = vmatprep.mubr.bf16.mxu0 %v407
  %759 = vmatmul.mubr.bf16.gmra.mrb[0].mxu0 %v406
  %v760 = vpop.f32.mrb[0].mxu0
  %v761 = vadd.f32 0.0, %v760
  %v762 = vpop.f32.mrb[0].mxu0
  %v763 = vadd.f32 0.0, %v762
  %v764 = vpop.f32.mrb[0].mxu0
  %v765 = vadd.f32 0.0, %v764
  %v766 = vpop.f32.mrb[0].mxu0
  %v767 = vadd.f32 0.0, %v766
  %768 = vmatprep.mubr.bf16.mxu0 %v409
  %769 = vmatmul.mubr.bf16.gmra.mrb[0].mxu0 %v408
  %v770 = vpop.f32.mrb[0].mxu0
  %v771 = vadd.f32 0.0, %v770
  %v772 = vpop.f32.mrb[0].mxu0
  %v773 = vadd.f32 0.0, %v772
  %v774 = vpop.f32.mrb[0].mxu0
  %v775 = vadd.f32 0.0, %v774
  %v776 = vpop.f32.mrb[0].mxu0
  %v777 = vadd.f32 0.0, %v776
  %778 = vmatprep.mubr.bf16.mxu0 %v411
  %779 = vmatmul.mubr.bf16.gmra.mrb[0].mxu0 %v410
  %v780 = vpop.f32.mrb[0].mxu0
  %v781 = vadd.f32 0.0, %v780
  %v782 = vpop.f32.mrb[0].mxu0
  %v783 = vadd.f32 0.0, %v782
  %v784 = vpop.f32.mrb[0].mxu0
  %v785 = vadd.f32 0.0, %v784
  %v786 = vpop.f32.mrb[0].mxu0
  %v787 = vadd.f32 0.0, %v786
  %788 = vmatprep.mubr.bf16.mxu0 %v413
  %789 = vmatmul.mubr.bf16.gmra.mrb[0].mxu0 %v412
  %v790 = vpop.f32.mrb[0].mxu0
  %v791 = vadd.f32 0.0, %v790
  %v792 = vpop.f32.mrb[0].mxu0
  %v793 = vadd.f32 0.0, %v792
  %v794 = vpop.f32.mrb[0].mxu0
  %v795 = vadd.f32 0.0, %v794
  %v796 = vpop.f32.mrb[0].mxu0
  %v797 = vadd.f32 0.0, %v796
  %798 = vmatprep.mubr.bf16.mxu0 %v415
  %799 = vmatmul.mubr.bf16.gmra.mrb[0].mxu0 %v414
  %v800 = vpop.f32.mrb[0].mxu0
  %v801 = vadd.f32 0.0, %v800
  %v802 = vpop.f32.mrb[0].mxu0
  %v803 = vadd.f32 0.0, %v802
  %v804 = vpop.f32.mrb[0].mxu0
  %v805 = vadd.f32 0.0, %v804
  %v806 = vpop.f32.mrb[0].mxu0
  %v807 = vadd.f32 0.0, %v806
  %808 = vmatprep.mubr.bf16.mxu0 %v417
  %809 = vmatmul.mubr.bf16.gmra.mrb[0].mxu0 %v416
  %v810 = vpop.f32.mrb[0].mxu0
  %v811 = vadd.f32 0.0, %v810
  %v812 = vpop.f32.mrb[0].mxu0
  %v813 = vadd.f32 0.0, %v812
  %v814 = vpop.f32.mrb[0].mxu0
  %v815 = vadd.f32 0.0, %v814
  %v816 = vpop.f32.mrb[0].mxu0
  %v817 = vadd.f32 0.0, %v816
  %818 = vmatprep.mubr.bf16.mxu0 %v419
  %819 = vmatmul.mubr.bf16.gmra.mrb[0].mxu0 %v418
  %v820 = vpop.f32.mrb[0].mxu0
  %v821 = vadd.f32 0.0, %v820
  %v822 = vpop.f32.mrb[0].mxu0
  %v823 = vadd.f32 0.0, %v822
  %v824 = vpop.f32.mrb[0].mxu0
  %v825 = vadd.f32 0.0, %v824
  %v826 = vpop.f32.mrb[0].mxu0
  %v827 = vadd.f32 0.0, %v826
  %828 = vmatprep.mubr.bf16.mxu0 %v421
  %829 = vmatmul.mubr.bf16.gmra.mrb[0].mxu0 %v420
  %v830 = vpop.f32.mrb[0].mxu0
  %v831 = vadd.f32 0.0, %v830
  %v832 = vpop.f32.mrb[0].mxu0
  %v833 = vadd.f32 0.0, %v832
  %v834 = vpop.f32.mrb[0].mxu0
  %v835 = vadd.f32 0.0, %v834
  %v836 = vpop.f32.mrb[0].mxu0
  %v837 = vadd.f32 0.0, %v836
  %838 = vmatprep.mubr.bf16.mxu0 %v423
  %839 = vmatmul.mubr.bf16.gmra.mrb[0].mxu0 %v422
  %v840 = vpop.f32.mrb[0].mxu0
  %v841 = vadd.f32 0.0, %v840
  %v842 = vpop.f32.mrb[0].mxu0
  %v843 = vadd.f32 0.0, %v842
  %v844 = vpop.f32.mrb[0].mxu0
  %v845 = vadd.f32 0.0, %v844
  %v846 = vpop.f32.mrb[0].mxu0
  %v847 = vadd.f32 0.0, %v846
  %848 = vmatprep.mubr.bf16.mxu0 %v425
  %849 = vmatmul.mubr.bf16.gmra.mrb[0].mxu0 %v424
  %v850 = vpop.f32.mrb[0].mxu0
  %v851 = vadd.f32 0.0, %v850
  %v852 = vpop.f32.mrb[0].mxu0
  %v853 = vadd.f32 0.0, %v852
  %v854 = vpop.f32.mrb[0].mxu0
  %v855 = vadd.f32 0.0, %v854
  %v856 = vpop.f32.mrb[0].mxu0
  %v857 = vadd.f32 0.0, %v856
  %858 = vmatprep.mubr.bf16.mxu0 %v427
  %859 = vmatmul.mubr.bf16.gmra.mrb[0].mxu0 %v426
  %v860 = vpop.f32.mrb[0].mxu0
  %v861 = vadd.f32 0.0, %v860
  %v862 = vpop.f32.mrb[0].mxu0
  %v863 = vadd.f32 0.0, %v862
  %v864 = vpop.f32.mrb[0].mxu0
  %v865 = vadd.f32 0.0, %v864
  %v866 = vpop.f32.mrb[0].mxu0
  %v867 = vadd.f32 0.0, %v866
  %868 = vmatprep.mubr.bf16.mxu0 %v429
  %869 = vmatmul.mubr.bf16.gmra.mrb[0].mxu0 %v428
  %v870 = vpop.f32.mrb[0].mxu0
  %v871 = vadd.f32 0.0, %v870
  %v872 = vpop.f32.mrb[0].mxu0
  %v873 = vadd.f32 0.0, %v872
  %v874 = vpop.f32.mrb[0].mxu0
  %v875 = vadd.f32 0.0, %v874
  %v876 = vpop.f32.mrb[0].mxu0
  %v877 = vadd.f32 0.0, %v876
  %878 = vmatprep.mubr.bf16.mxu0 %v431
  %879 = vmatmul.mubr.bf16.gmra.mrb[0].mxu0 %v430
  %v880 = vpop.f32.mrb[0].mxu0
  %v881 = vadd.f32 0.0, %v880
  %v882 = vpop.f32.mrb[0].mxu0
  %v883 = vadd.f32 0.0, %v882
  %v884 = vpop.f32.mrb[0].mxu0
  %v885 = vadd.f32 0.0, %v884
  %v886 = vpop.f32.mrb[0].mxu0
  %v887 = vadd.f32 0.0, %v886
  %888 = vmatprep.mubr.bf16.mxu0 %v433
  %889 = vmatmul.mubr.bf16.gmra.mrb[0].mxu0 %v432
  %v890 = vpop.f32.mrb[0].mxu0
  %v891 = vadd.f32 0.0, %v890
  %v892 = vpop.f32.mrb[0].mxu0
  %v893 = vadd.f32 0.0, %v892
  %v894 = vpop.f32.mrb[0].mxu0
  %v895 = vadd.f32 0.0, %v894
  %v896 = vpop.f32.mrb[0].mxu0
  %v897 = vadd.f32 0.0, %v896
  %898 = vmatprep.mubr.bf16.mxu0 %v435
  %899 = vmatmul.mubr.bf16.gmra.mrb[0].mxu0 %v434
  %v900 = vpop.f32.mrb[0].mxu0
  %v901 = vadd.f32 0.0, %v900
  %v902 = vpop.f32.mrb[0].mxu0
  %v903 = vadd.f32 0.0, %v902
  %v904 = vpop.f32.mrb[0].mxu0
  %v905 = vadd.f32 0.0, %v904
  %v906 = vpop.f32.mrb[0].mxu0
  %v907 = vadd.f32 0.0, %v906
  %908 = vmatprep.mubr.bf16.mxu0 %v437
  %909 = vmatmul.mubr.bf16.gmra.mrb[0].mxu0 %v436
  %v910 = vpop.f32.mrb[0].mxu0
  %v911 = vadd.f32 0.0, %v910
  %v912 = vpop.f32.mrb[0].mxu0
  %v913 = vadd.f32 0.0, %v912
  %v914 = vpop.f32.mrb[0].mxu0
  %v915 = vadd.f32 0.0, %v914
  %v916 = vpop.f32.mrb[0].mxu0
  %v917 = vadd.f32 0.0, %v916
  %918 = vdwg.mxu0
  %919 = vmatprep.subr.bf16.mxu0 0
  %920 = vmatpush1.bf16.msra.mxu0 %v632
  %921 = vmatprep.subr.bf16.mxu0 0
  %922 = vmatpush1.bf16.msra.mxu0 %v635
  %923 = vmatprep.subr.bf16.mxu0 0
  %924 = vmatpush1.bf16.msra.mxu0 %v638
  %925 = vmatprep.subr.bf16.mxu0 0
  %926 = vmatpush1.bf16.msra.mxu0 %v641
  %927 = vmatprep.subr.bf16.mxu0 0
  %928 = vmatpush1.bf16.msra.mxu0 %v644
  %929 = vmatprep.subr.bf16.mxu0 0
  %930 = vmatpush1.bf16.msra.mxu0 %v647
  %931 = vmatprep.subr.bf16.mxu0 0
  %932 = vmatpush1.bf16.msra.mxu0 %v650
  %933 = vmatprep.subr.bf16.mxu0 0
  %934 = vmatpush1.bf16.msra.mxu0 %v653
  %935 = vmatprep.subr.bf16.mxu0 0
  %936 = vmatpush1.bf16.msra.mxu0 %v656
  %937 = vmatprep.subr.bf16.mxu0 0
  %938 = vmatpush1.bf16.msra.mxu0 %v659
  %939 = vmatprep.subr.bf16.mxu0 0
  %940 = vmatpush1.bf16.msra.mxu0 %v662
  %941 = vmatprep.subr.bf16.mxu0 0
  %942 = vmatpush1.bf16.msra.mxu0 %v665
  %943 = vmatprep.subr.bf16.mxu0 0
  %944 = vmatpush1.bf16.msra.mxu0 %v668
  %945 = vmatprep.subr.bf16.mxu0 0
  %946 = vmatpush1.bf16.msra.mxu0 %v671
  %947 = vmatprep.subr.bf16.mxu0 0
  %948 = vmatpush1.bf16.msra.mxu0 %v674
  %949 = vmatprep.subr.bf16.mxu0 0
  %950 = vmatpush1.bf16.msra.mxu0 %v677
  %951 = vmatprep.mubr.bf16.mxu0 %v407
  %952 = vmatmul.mubr.bf16.gmra.mrb[0].mxu0 %v406
  %v953 = vpop.f32.mrb[0].mxu0
  %v954 = vadd.f32 0.0, %v953
  %v955 = vpop.f32.mrb[0].mxu0
  %v956 = vpop.f32.mrb[0].mxu0
  %v957 = vadd.f32 0.0, %v956
  %v958 = vpop.f32.mrb[0].mxu0
  %959 = vmatprep.mubr.bf16.mxu0 %v409
  %960 = vmatmul.mubr.bf16.gmra.mrb[0].mxu0 %v408
  %v961 = vpop.f32.mrb[0].mxu0
  %v962 = vadd.f32 0.0, %v961
  %v963 = vpop.f32.mrb[0].mxu0
  %v964 = vpop.f32.mrb[0].mxu0
  %v965 = vadd.f32 0.0, %v964
  %v966 = vpop.f32.mrb[0].mxu0
  %967 = vmatprep.mubr.bf16.mxu0 %v411
  %968 = vmatmul.mubr.bf16.gmra.mrb[0].mxu0 %v410
  %v969 = vpop.f32.mrb[0].mxu0
  %v970 = vadd.f32 0.0, %v969
  %v971 = vpop.f32.mrb[0].mxu0
  %v972 = vpop.f32.mrb[0].mxu0
  %v973 = vadd.f32 0.0, %v972
  %v974 = vpop.f32.mrb[0].mxu0
  %975 = vmatprep.mubr.bf16.mxu0 %v413
  %976 = vmatmul.mubr.bf16.gmra.mrb[0].mxu0 %v412
  %v977 = vpop.f32.mrb[0].mxu0
  %v978 = vadd.f32 0.0, %v977
  %v979 = vpop.f32.mrb[0].mxu0
  %v980 = vpop.f32.mrb[0].mxu0
  %v981 = vadd.f32 0.0, %v980
  %v982 = vpop.f32.mrb[0].mxu0
  %983 = vmatprep.mubr.bf16.mxu0 %v415
  %984 = vmatmul.mubr.bf16.gmra.mrb[0].mxu0 %v414
  %v985 = vpop.f32.mrb[0].mxu0
  %v986 = vadd.f32 0.0, %v985
  %v987 = vpop.f32.mrb[0].mxu0
  %v988 = vpop.f32.mrb[0].mxu0
  %v989 = vadd.f32 0.0, %v988
  %v990 = vpop.f32.mrb[0].mxu0
  %991 = vmatprep.mubr.bf16.mxu0 %v417
  %992 = vmatmul.mubr.bf16.gmra.mrb[0].mxu0 %v416
  %v993 = vpop.f32.mrb[0].mxu0
  %v994 = vadd.f32 0.0, %v993
  %v995 = vpop.f32.mrb[0].mxu0
  %v996 = vpop.f32.mrb[0].mxu0
  %v997 = vadd.f32 0.0, %v996
  %v998 = vpop.f32.mrb[0].mxu0
  %999 = vmatprep.mubr.bf16.mxu0 %v419
  %1000 = vmatmul.mubr.bf16.gmra.mrb[0].mxu0 %v418
  %v1001 = vpop.f32.mrb[0].mxu0
  %v1002 = vadd.f32 0.0, %v1001
  %v1003 = vpop.f32.mrb[0].mxu0
  %v1004 = vpop.f32.mrb[0].mxu0
  %v1005 = vadd.f32 0.0, %v1004
  %v1006 = vpop.f32.mrb[0].mxu0
  %1007 = vmatprep.mubr.bf16.mxu0 %v421
  %1008 = vmatmul.mubr.bf16.gmra.mrb[0].mxu0 %v420
  %v1009 = vpop.f32.mrb[0].mxu0
  %v1010 = vadd.f32 0.0, %v1009
  %v1011 = vpop.f32.mrb[0].mxu0
  %v1012 = vpop.f32.mrb[0].mxu0
  %v1013 = vadd.f32 0.0, %v1012
  %v1014 = vpop.f32.mrb[0].mxu0
  %1015 = vmatprep.mubr.bf16.mxu0 %v423
  %1016 = vmatmul.mubr.bf16.gmra.mrb[0].mxu0 %v422
  %v1017 = vpop.f32.mrb[0].mxu0
  %v1018 = vadd.f32 0.0, %v1017
  %v1019 = vpop.f32.mrb[0].mxu0
  %v1020 = vpop.f32.mrb[0].mxu0
  %v1021 = vadd.f32 0.0, %v1020
  %v1022 = vpop.f32.mrb[0].mxu0
  %1023 = vmatprep.mubr.bf16.mxu0 %v425
  %1024 = vmatmul.mubr.bf16.gmra.mrb[0].mxu0 %v424
  %v1025 = vpop.f32.mrb[0].mxu0
  %v1026 = vadd.f32 0.0, %v1025
  %v1027 = vpop.f32.mrb[0].mxu0
  %v1028 = vpop.f32.mrb[0].mxu0
  %v1029 = vadd.f32 0.0, %v1028
  %v1030 = vpop.f32.mrb[0].mxu0
  %1031 = vmatprep.mubr.bf16.mxu0 %v427
  %1032 = vmatmul.mubr.bf16.gmra.mrb[0].mxu0 %v426
  %v1033 = vpop.f32.mrb[0].mxu0
  %v1034 = vadd.f32 0.0, %v1033
  %v1035 = vpop.f32.mrb[0].mxu0
  %v1036 = vpop.f32.mrb[0].mxu0
  %v1037 = vadd.f32 0.0, %v1036
  %v1038 = vpop.f32.mrb[0].mxu0
  %1039 = vmatprep.mubr.bf16.mxu0 %v429
  %1040 = vmatmul.mubr.bf16.gmra.mrb[0].mxu0 %v428
  %v1041 = vpop.f32.mrb[0].mxu0
  %v1042 = vadd.f32 0.0, %v1041
  %v1043 = vpop.f32.mrb[0].mxu0
  %v1044 = vpop.f32.mrb[0].mxu0
  %v1045 = vadd.f32 0.0, %v1044
  %v1046 = vpop.f32.mrb[0].mxu0
  %1047 = vmatprep.mubr.bf16.mxu0 %v431
  %1048 = vmatmul.mubr.bf16.gmra.mrb[0].mxu0 %v430
  %v1049 = vpop.f32.mrb[0].mxu0
  %v1050 = vadd.f32 0.0, %v1049
  %v1051 = vpop.f32.mrb[0].mxu0
  %v1052 = vpop.f32.mrb[0].mxu0
  %v1053 = vadd.f32 0.0, %v1052
  %v1054 = vpop.f32.mrb[0].mxu0
  %1055 = vmatprep.mubr.bf16.mxu0 %v433
  %1056 = vmatmul.mubr.bf16.gmra.mrb[0].mxu0 %v432
  %v1057 = vpop.f32.mrb[0].mxu0
  %v1058 = vadd.f32 0.0, %v1057
  %v1059 = vpop.f32.mrb[0].mxu0
  %v1060 = vpop.f32.mrb[0].mxu0
  %v1061 = vadd.f32 0.0, %v1060
  %v1062 = vpop.f32.mrb[0].mxu0
  %1063 = vmatprep.mubr.bf16.mxu0 %v435
  %1064 = vmatmul.mubr.bf16.gmra.mrb[0].mxu0 %v434
  %v1065 = vpop.f32.mrb[0].mxu0
  %v1066 = vadd.f32 0.0, %v1065
  %v1067 = vpop.f32.mrb[0].mxu0
  %v1068 = vpop.f32.mrb[0].mxu0
  %v1069 = vadd.f32 0.0, %v1068
  %v1070 = vpop.f32.mrb[0].mxu0
  %1071 = vmatprep.mubr.bf16.mxu0 %v437
  %1072 = vmatmul.mubr.bf16.gmra.mrb[0].mxu0 %v436
  %v1073 = vpop.f32.mrb[0].mxu0
  %v1074 = vadd.f32 0.0, %v1073
  %v1075 = vpop.f32.mrb[0].mxu0
  %v1076 = vpop.f32.mrb[0].mxu0
  %v1077 = vadd.f32 0.0, %v1076
  %v1078 = vpop.f32.mrb[0].mxu0
  %1079 = vdwg.mxu0
  %v1080 = vadd.f32 %v118, %v761
  %v1081 = vadd.f32 %v119, %v763
  %v1082 = vadd.f32 %v120, %v954
  %v1083 = vadd.f32 %v121, %v765
  %v1084 = vadd.f32 %v122, %v767
  %v1085 = vadd.f32 %v123, %v957
  %v1086 = vadd.f32 %v124, %v771
  %v1087 = vadd.f32 %v125, %v773
  %v1088 = vadd.f32 %v126, %v962
  %v1089 = vadd.f32 %v127, %v775
  %v1090 = vadd.f32 %v128, %v777
  %v1091 = vadd.f32 %v129, %v965
  %v1092 = vadd.f32 %v130, %v781
  %v1093 = vadd.f32 %v131, %v783
  %v1094 = vadd.f32 %v132, %v970
  %v1095 = vadd.f32 %v133, %v785
  %v1096 = vadd.f32 %v134, %v787
  %v1097 = vadd.f32 %v135, %v973
  %v1098 = vadd.f32 %v136, %v791
  %v1099 = vadd.f32 %v137, %v793
  %v1100 = vadd.f32 %v138, %v978
  %v1101 = vadd.f32 %v139, %v795
  %v1102 = vadd.f32 %v140, %v797
  %v1103 = vadd.f32 %v141, %v981
  %v1104 = vadd.f32 %v142, %v801
  %v1105 = vadd.f32 %v143, %v803
  %v1106 = vadd.f32 %v144, %v986
  %v1107 = vadd.f32 %v145, %v805
  %v1108 = vadd.f32 %v146, %v807
  %v1109 = vadd.f32 %v147, %v989
  %v1110 = vadd.f32 %v148, %v811
  %v1111 = vadd.f32 %v149, %v813
  %v1112 = vadd.f32 %v150, %v994
  %v1113 = vadd.f32 %v151, %v815
  %v1114 = vadd.f32 %v152, %v817
  %v1115 = vadd.f32 %v153, %v997
  %v1116 = vadd.f32 %v154, %v821
  %v1117 = vadd.f32 %v155, %v823
  %v1118 = vadd.f32 %v156, %v1002
  %v1119 = vadd.f32 %v157, %v825
  %v1120 = vadd.f32 %v158, %v827
  %v1121 = vadd.f32 %v159, %v1005
  %v1122 = vadd.f32 %v160, %v831
  %v1123 = vadd.f32 %v161, %v833
  %v1124 = vadd.f32 %v162, %v1010
  %v1125 = vadd.f32 %v163, %v835
  %v1126 = vadd.f32 %v164, %v837
  %v1127 = vadd.f32 %v165, %v1013
  %v1128 = vadd.f32 %v166, %v841
  %v1129 = vadd.f32 %v167, %v843
  %v1130 = vadd.f32 %v168, %v1018
  %v1131 = vadd.f32 %v169, %v845
  %v1132 = vadd.f32 %v170, %v847
  %v1133 = vadd.f32 %v171, %v1021
  %v1134 = vadd.f32 %v172, %v851
  %v1135 = vadd.f32 %v173, %v853
  %v1136 = vadd.f32 %v174, %v1026
  %v1137 = vadd.f32 %v175, %v855
  %v1138 = vadd.f32 %v176, %v857
  %v1139 = vadd.f32 %v177, %v1029
  %v1140 = vadd.f32 %v178, %v861
  %v1141 = vadd.f32 %v179, %v863
  %v1142 = vadd.f32 %v180, %v1034
  %v1143 = vadd.f32 %v181, %v865
  %v1144 = vadd.f32 %v182, %v867
  %v1145 = vadd.f32 %v183, %v1037
  %v1146 = vadd.f32 %v184, %v871
  %v1147 = vadd.f32 %v185, %v873
  %v1148 = vadd.f32 %v186, %v1042
  %v1149 = vadd.f32 %v187, %v875
  %v1150 = vadd.f32 %v188, %v877
  %v1151 = vadd.f32 %v189, %v1045
  %v1152 = vadd.f32 %v190, %v881
  %v1153 = vadd.f32 %v191, %v883
  %v1154 = vadd.f32 %v192, %v1050
  %v1155 = vadd.f32 %v193, %v885
  %v1156 = vadd.f32 %v194, %v887
  %v1157 = vadd.f32 %v195, %v1053
  %v1158 = vadd.f32 %v196, %v891
  %v1159 = vadd.f32 %v197, %v893
  %v1160 = vadd.f32 %v198, %v1058
  %v1161 = vadd.f32 %v199, %v895
  %v1162 = vadd.f32 %v200, %v897
  %v1163 = vadd.f32 %v201, %v1061
  %v1164 = vadd.f32 %v202, %v901
  %v1165 = vadd.f32 %v203, %v903
  %v1166 = vadd.f32 %v204, %v1066
  %v1167 = vadd.f32 %v205, %v905
  %v1168 = vadd.f32 %v206, %v907
  %v1169 = vadd.f32 %v207, %v1069
  %v1170 = vadd.f32 %v208, %v911
  %v1171 = vadd.f32 %v209, %v913
  %v1172 = vadd.f32 %v210, %v1074
  %v1173 = vadd.f32 %v211, %v915
  %v1174 = vadd.f32 %v212, %v917
  %v1175 = vadd.f32 %v213, %v1077
  %1176 = vst [vmem:[#allocation2] sm:$0xff] %v1080
  %1177 = vst [vmem:[#allocation2 + $0x8] sm:$0xff] %v1081
  %1178 = vst [vmem:[#allocation2 + $0x10] sm:$0xff] %v1082
  %1179 = vst [vmem:[#allocation2 + $0x18] sm:$0xff] %v1083
  %1180 = vst [vmem:[#allocation2 + $0x20] sm:$0xff] %v1084
  %1181 = vst [vmem:[#allocation2 + $0x28] sm:$0xff] %v1085
  %1182 = vst [vmem:[#allocation2 + $0x30] sm:$0xff] %v1086
  %1183 = vst [vmem:[#allocation2 + $0x38] sm:$0xff] %v1087
  %1184 = vst [vmem:[#allocation2 + $0x40] sm:$0xff] %v1088
  %1185 = vst [vmem:[#allocation2 + $0x48] sm:$0xff] %v1089
  %1186 = vst [vmem:[#allocation2 + $0x50] sm:$0xff] %v1090
  %1187 = vst [vmem:[#allocation2 + $0x58] sm:$0xff] %v1091
  %1188 = vst [vmem:[#allocation2 + $0x60] sm:$0xff] %v1092
  %1189 = vst [vmem:[#allocation2 + $0x68] sm:$0xff] %v1093
  %1190 = vst [vmem:[#allocation2 + $0x70] sm:$0xff] %v1094
  %1191 = vst [vmem:[#allocation2 + $0x78] sm:$0xff] %v1095
  %1192 = vst [vmem:[#allocation2 + $0x80] sm:$0xff] %v1096
  %1193 = vst [vmem:[#allocation2 + $0x88] sm:$0xff] %v1097
  %1194 = vst [vmem:[#allocation2 + $0x90] sm:$0xff] %v1098
  %1195 = vst [vmem:[#allocation2 + $0x98] sm:$0xff] %v1099
  %1196 = vst [vmem:[#allocation2 + $0xa0] sm:$0xff] %v1100
  %1197 = vst [vmem:[#allocation2 + $0xa8] sm:$0xff] %v1101
  %1198 = vst [vmem:[#allocation2 + $0xb0] sm:$0xff] %v1102
  %1199 = vst [vmem:[#allocation2 + $0xb8] sm:$0xff] %v1103
  %1200 = vst [vmem:[#allocation2 + $0xc0] sm:$0xff] %v1104
  %1201 = vst [vmem:[#allocation2 + $0xc8] sm:$0xff] %v1105
  %1202 = vst [vmem:[#allocation2 + $0xd0] sm:$0xff] %v1106
  %1203 = vst [vmem:[#allocation2 + $0xd8] sm:$0xff] %v1107
  %1204 = vst [vmem:[#allocation2 + $0xe0] sm:$0xff] %v1108
  %1205 = vst [vmem:[#allocation2 + $0xe8] sm:$0xff] %v1109
  %1206 = vst [vmem:[#allocation2 + $0xf0] sm:$0xff] %v1110
  %1207 = vst [vmem:[#allocation2 + $0xf8] sm:$0xff] %v1111
  %1208 = vst [vmem:[#allocation2 + $0x100] sm:$0xff] %v1112
  %1209 = vst [vmem:[#allocation2 + $0x108] sm:$0xff] %v1113
  %1210 = vst [vmem:[#allocation2 + $0x110] sm:$0xff] %v1114
  %1211 = vst [vmem:[#allocation2 + $0x118] sm:$0xff] %v1115
  %1212 = vst [vmem:[#allocation2 + $0x120] sm:$0xff] %v1116
  %1213 = vst [vmem:[#allocation2 + $0x128] sm:$0xff] %v1117
  %1214 = vst [vmem:[#allocation2 + $0x130] sm:$0xff] %v1118
  %1215 = vst [vmem:[#allocation2 + $0x138] sm:$0xff] %v1119
  %1216 = vst [vmem:[#allocation2 + $0x140] sm:$0xff] %v1120
  %1217 = vst [vmem:[#allocation2 + $0x148] sm:$0xff] %v1121
  %1218 = vst [vmem:[#allocation2 + $0x150] sm:$0xff] %v1122
  %1219 = vst [vmem:[#allocation2 + $0x158] sm:$0xff] %v1123
  %1220 = vst [vmem:[#allocation2 + $0x160] sm:$0xff] %v1124
  %1221 = vst [vmem:[#allocation2 + $0x168] sm:$0xff] %v1125
  %1222 = vst [vmem:[#allocation2 + $0x170] sm:$0xff] %v1126
  %1223 = vst [vmem:[#allocation2 + $0x178] sm:$0xff] %v1127
  %1224 = vst [vmem:[#allocation2 + $0x180] sm:$0xff] %v1128
  %1225 = vst [vmem:[#allocation2 + $0x188] sm:$0xff] %v1129
  %1226 = vst [vmem:[#allocation2 + $0x190] sm:$0xff] %v1130
  %1227 = vst [vmem:[#allocation2 + $0x198] sm:$0xff] %v1131
  %1228 = vst [vmem:[#allocation2 + $0x1a0] sm:$0xff] %v1132
  %1229 = vst [vmem:[#allocation2 + $0x1a8] sm:$0xff] %v1133
  %1230 = vst [vmem:[#allocation2 + $0x1b0] sm:$0xff] %v1134
  %1231 = vst [vmem:[#allocation2 + $0x1b8] sm:$0xff] %v1135
  %1232 = vst [vmem:[#allocation2 + $0x1c0] sm:$0xff] %v1136
  %1233 = vst [vmem:[#allocation2 + $0x1c8] sm:$0xff] %v1137
  %1234 = vst [vmem:[#allocation2 + $0x1d0] sm:$0xff] %v1138
  %1235 = vst [vmem:[#allocation2 + $0x1d8] sm:$0xff] %v1139
  %1236 = vst [vmem:[#allocation2 + $0x1e0] sm:$0xff] %v1140
  %1237 = vst [vmem:[#allocation2 + $0x1e8] sm:$0xff] %v1141
  %1238 = vst [vmem:[#allocation2 + $0x1f0] sm:$0xff] %v1142
  %1239 = vst [vmem:[#allocation2 + $0x1f8] sm:$0xff] %v1143
  %1240 = vst [vmem:[#allocation2 + $0x200] sm:$0xff] %v1144
  %1241 = vst [vmem:[#allocation2 + $0x208] sm:$0xff] %v1145
  %1242 = vst [vmem:[#allocation2 + $0x210] sm:$0xff] %v1146
  %1243 = vst [vmem:[#allocation2 + $0x218] sm:$0xff] %v1147
  %1244 = vst [vmem:[#allocation2 + $0x220] sm:$0xff] %v1148
  %1245 = vst [vmem:[#allocation2 + $0x228] sm:$0xff] %v1149
  %1246 = vst [vmem:[#allocation2 + $0x230] sm:$0xff] %v1150
  %1247 = vst [vmem:[#allocation2 + $0x238] sm:$0xff] %v1151
  %1248 = vst [vmem:[#allocation2 + $0x240] sm:$0xff] %v1152
  %1249 = vst [vmem:[#allocation2 + $0x248] sm:$0xff] %v1153
  %1250 = vst [vmem:[#allocation2 + $0x250] sm:$0xff] %v1154
  %1251 = vst [vmem:[#allocation2 + $0x258] sm:$0xff] %v1155
  %1252 = vst [vmem:[#allocation2 + $0x260] sm:$0xff] %v1156
  %1253 = vst [vmem:[#allocation2 + $0x268] sm:$0xff] %v1157
  %1254 = vst [vmem:[#allocation2 + $0x270] sm:$0xff] %v1158
  %1255 = vst [vmem:[#allocation2 + $0x278] sm:$0xff] %v1159
  %1256 = vst [vmem:[#allocation2 + $0x280] sm:$0xff] %v1160
  %1257 = vst [vmem:[#allocation2 + $0x288] sm:$0xff] %v1161
  %1258 = vst [vmem:[#allocation2 + $0x290] sm:$0xff] %v1162
  %1259 = vst [vmem:[#allocation2 + $0x298] sm:$0xff] %v1163
  %1260 = vst [vmem:[#allocation2 + $0x2a0] sm:$0xff] %v1164
  %1261 = vst [vmem:[#allocation2 + $0x2a8] sm:$0xff] %v1165
  %1262 = vst [vmem:[#allocation2 + $0x2b0] sm:$0xff] %v1166
  %1263 = vst [vmem:[#allocation2 + $0x2b8] sm:$0xff] %v1167
  %1264 = vst [vmem:[#allocation2 + $0x2c0] sm:$0xff] %v1168
  %1265 = vst [vmem:[#allocation2 + $0x2c8] sm:$0xff] %v1169
  %1266 = vst [vmem:[#allocation2 + $0x2d0] sm:$0xff] %v1170
  %1267 = vst [vmem:[#allocation2 + $0x2d8] sm:$0xff] %v1171
  %1268 = vst [vmem:[#allocation2 + $0x2e0] sm:$0xff] %v1172
  %1269 = vst [vmem:[#allocation2 + $0x2e8] sm:$0xff] %v1173
  %1270 = vst [vmem:[#allocation2 + $0x2f0] sm:$0xff] %v1174
  %1271 = vst [vmem:[#allocation2 + $0x2f8] sm:$0xff] %v1175
  // Predicated region
  $region22: #{dgi_forward_padded.4} parent=0 // pred_check
    %p1272 = pneg %p18
  $region23: #{dgi_forward_padded.4} parent=0 // pred_check_branch
    %1274 = sbr.rel (%p1272) target = $region25
  $region24: #{dgi_forward_padded.4} parent=0 // pred_region
    %v1275 = vld [vmem:[#allocation2] sm:$0xff]
    %v1276 = vld [vmem:[#allocation2 + $0x8] sm:$0xff]
    %v1277 = vld [vmem:[#allocation2 + $0x10] sm:$0xff]
    %v1278 = vld [vmem:[#allocation2 + $0x18] sm:$0xff]
    %v1279 = vld [vmem:[#allocation2 + $0x20] sm:$0xff]
    %v1280 = vld [vmem:[#allocation2 + $0x28] sm:$0xff]
    %v1281 = vld [vmem:[#allocation2 + $0x30] sm:$0xff]
    %v1282 = vld [vmem:[#allocation2 + $0x38] sm:$0xff]
    %v1283 = vld [vmem:[#allocation2 + $0x40] sm:$0xff]
    %v1284 = vld [vmem:[#allocation2 + $0x48] sm:$0xff]
    %v1285 = vld [vmem:[#allocation2 + $0x50] sm:$0xff]
    %v1286 = vld [vmem:[#allocation2 + $0x58] sm:$0xff]
    %v1287 = vld [vmem:[#allocation2 + $0x60] sm:$0xff]
    %v1288 = vld [vmem:[#allocation2 + $0x68] sm:$0xff]
    %v1289 = vld [vmem:[#allocation2 + $0x70] sm:$0xff]
    %v1290 = vld [vmem:[#allocation2 + $0x78] sm:$0xff]
    %v1291 = vld [vmem:[#allocation2 + $0x80] sm:$0xff]
    %v1292 = vld [vmem:[#allocation2 + $0x88] sm:$0xff]
    %v1293 = vld [vmem:[#allocation2 + $0x90] sm:$0xff]
    %v1294 = vld [vmem:[#allocation2 + $0x98] sm:$0xff]
    %v1295 = vld [vmem:[#allocation2 + $0xa0] sm:$0xff]
    %v1296 = vld [vmem:[#allocation2 + $0xa8] sm:$0xff]
    %v1297 = vld [vmem:[#allocation2 + $0xb0] sm:$0xff]
    %v1298 = vld [vmem:[#allocation2 + $0xb8] sm:$0xff]
    %v1299 = vld [vmem:[#allocation2 + $0xc0] sm:$0xff]
    %v1300 = vld [vmem:[#allocation2 + $0xc8] sm:$0xff]
    %v1301 = vld [vmem:[#allocation2 + $0xd0] sm:$0xff]
    %v1302 = vld [vmem:[#allocation2 + $0xd8] sm:$0xff]
    %v1303 = vld [vmem:[#allocation2 + $0xe0] sm:$0xff]
    %v1304 = vld [vmem:[#allocation2 + $0xe8] sm:$0xff]
    %v1305 = vld [vmem:[#allocation2 + $0xf0] sm:$0xff]
    %v1306 = vld [vmem:[#allocation2 + $0xf8] sm:$0xff]
    %v1307 = vld [vmem:[#allocation2 + $0x100] sm:$0xff]
    %v1308 = vld [vmem:[#allocation2 + $0x108] sm:$0xff]
    %v1309 = vld [vmem:[#allocation2 + $0x110] sm:$0xff]
    %v1310 = vld [vmem:[#allocation2 + $0x118] sm:$0xff]
    %v1311 = vld [vmem:[#allocation2 + $0x120] sm:$0xff]
    %v1312 = vld [vmem:[#allocation2 + $0x128] sm:$0xff]
    %v1313 = vld [vmem:[#allocation2 + $0x130] sm:$0xff]
    %v1314 = vld [vmem:[#allocation2 + $0x138] sm:$0xff]
    %v1315 = vld [vmem:[#allocation2 + $0x140] sm:$0xff]
    %v1316 = vld [vmem:[#allocation2 + $0x148] sm:$0xff]
    %v1317 = vld [vmem:[#allocation2 + $0x150] sm:$0xff]
    %v1318 = vld [vmem:[#allocation2 + $0x158] sm:$0xff]
    %v1319 = vld [vmem:[#allocation2 + $0x160] sm:$0xff]
    %v1320 = vld [vmem:[#allocation2 + $0x168] sm:$0xff]
    %v1321 = vld [vmem:[#allocation2 + $0x170] sm:$0xff]
    %v1322 = vld [vmem:[#allocation2 + $0x178] sm:$0xff]
    %v1323 = vld [vmem:[#allocation2 + $0x180] sm:$0xff]
    %v1324 = vld [vmem:[#allocation2 + $0x188] sm:$0xff]
    %v1325 = vld [vmem:[#allocation2 + $0x190] sm:$0xff]
    %v1326 = vld [vmem:[#allocation2 + $0x198] sm:$0xff]
    %v1327 = vld [vmem:[#allocation2 + $0x1a0] sm:$0xff]
    %v1328 = vld [vmem:[#allocation2 + $0x1a8] sm:$0xff]
    %v1329 = vld [vmem:[#allocation2 + $0x1b0] sm:$0xff]
    %v1330 = vld [vmem:[#allocation2 + $0x1b8] sm:$0xff]
    %v1331 = vld [vmem:[#allocation2 + $0x1c0] sm:$0xff]
    %v1332 = vld [vmem:[#allocation2 + $0x1c8] sm:$0xff]
    %v1333 = vld [vmem:[#allocation2 + $0x1d0] sm:$0xff]
    %v1334 = vld [vmem:[#allocation2 + $0x1d8] sm:$0xff]
    %v1335 = vld [vmem:[#allocation2 + $0x1e0] sm:$0xff]
    %v1336 = vld [vmem:[#allocation2 + $0x1e8] sm:$0xff]
    %v1337 = vld [vmem:[#allocation2 + $0x1f0] sm:$0xff]
    %v1338 = vld [vmem:[#allocation2 + $0x1f8] sm:$0xff]
    %v1339 = vld [vmem:[#allocation2 + $0x200] sm:$0xff]
    %v1340 = vld [vmem:[#allocation2 + $0x208] sm:$0xff]
    %v1341 = vld [vmem:[#allocation2 + $0x210] sm:$0xff]
    %v1342 = vld [vmem:[#allocation2 + $0x218] sm:$0xff]
    %v1343 = vld [vmem:[#allocation2 + $0x220] sm:$0xff]
    %v1344 = vld [vmem:[#allocation2 + $0x228] sm:$0xff]
    %v1345 = vld [vmem:[#allocation2 + $0x230] sm:$0xff]
    %v1346 = vld [vmem:[#allocation2 + $0x238] sm:$0xff]
    %v1347 = vld [vmem:[#allocation2 + $0x240] sm:$0xff]
    %v1348 = vld [vmem:[#allocation2 + $0x248] sm:$0xff]
    %v1349 = vld [vmem:[#allocation2 + $0x250] sm:$0xff]
    %v1350 = vld [vmem:[#allocation2 + $0x258] sm:$0xff]
    %v1351 = vld [vmem:[#allocation2 + $0x260] sm:$0xff]
    %v1352 = vld [vmem:[#allocation2 + $0x268] sm:$0xff]
    %v1353 = vld [vmem:[#allocation2 + $0x270] sm:$0xff]
    %v1354 = vld [vmem:[#allocation2 + $0x278] sm:$0xff]
    %v1355 = vld [vmem:[#allocation2 + $0x280] sm:$0xff]
    %v1356 = vld [vmem:[#allocation2 + $0x288] sm:$0xff]
    %v1357 = vld [vmem:[#allocation2 + $0x290] sm:$0xff]
    %v1358 = vld [vmem:[#allocation2 + $0x298] sm:$0xff]
    %v1359 = vld [vmem:[#allocation2 + $0x2a0] sm:$0xff]
    %v1360 = vld [vmem:[#allocation2 + $0x2a8] sm:$0xff]
    %v1361 = vld [vmem:[#allocation2 + $0x2b0] sm:$0xff]
    %v1362 = vld [vmem:[#allocation2 + $0x2b8] sm:$0xff]
    %v1363 = vld [vmem:[#allocation2 + $0x2c0] sm:$0xff]
    %v1364 = vld [vmem:[#allocation2 + $0x2c8] sm:$0xff]
    %v1365 = vld [vmem:[#allocation2 + $0x2d0] sm:$0xff]
    %v1366 = vld [vmem:[#allocation2 + $0x2d8] sm:$0xff]
    %v1367 = vld [vmem:[#allocation2 + $0x2e0] sm:$0xff]
    %v1368 = vld [vmem:[#allocation2 + $0x2e8] sm:$0xff]
    %v1369 = vld [vmem:[#allocation2 + $0x2f0] sm:$0xff]
    %v1370 = vld [vmem:[#allocation2 + $0x2f8] sm:$0xff]
    %v1371 = vld [vmem:[%s2] sm:$0xff]
    %v1372 = vld [vmem:[%s2 + $0x8] sm:$0xff]
    %v1373 = vld [vmem:[%s2 + $0x10] sm:$0xff]
    %v1374 = vld [vmem:[%s2 + $0x18] sm:$0xff]
    %v1375 = vld [vmem:[%s2 + $0x20] sm:$0xff]
    %v1376 = vld [vmem:[%s2 + $0x28] sm:$0xff]
    %v1377 = vld [vmem:[%s2 + $0x30] sm:$0xff]
    %v1378 = vld [vmem:[%s2 + $0x38] sm:$0xff]
    %v1379 = vld [vmem:[%s2 + $0x40] sm:$0xff]
    %v1380 = vld [vmem:[%s2 + $0x48] sm:$0xff]
    %v1381 = vld [vmem:[%s2 + $0x50] sm:$0xff]
    %v1382 = vld [vmem:[%s2 + $0x58] sm:$0xff]
    %v1383 = vld [vmem:[%s2 + $0x60] sm:$0xff]
    %v1384 = vld [vmem:[%s2 + $0x68] sm:$0xff]
    %v1385 = vld [vmem:[%s2 + $0x70] sm:$0xff]
    %v1386 = vld [vmem:[%s2 + $0x78] sm:$0xff]
    %v1387 = vld [vmem:[%s2 + $0x80] sm:$0xff]
    %v1388 = vld [vmem:[%s2 + $0x88] sm:$0xff]
    %v1389 = vld [vmem:[%s2 + $0x90] sm:$0xff]
    %v1390 = vld [vmem:[%s2 + $0x98] sm:$0xff]
    %v1391 = vld [vmem:[%s2 + $0xa0] sm:$0xff]
    %v1392 = vld [vmem:[%s2 + $0xa8] sm:$0xff]
    %v1393 = vld [vmem:[%s2 + $0xb0] sm:$0xff]
    %v1394 = vld [vmem:[%s2 + $0xb8] sm:$0xff]
    %v1395 = vld [vmem:[%s2 + $0xc0] sm:$0xff]
    %v1396 = vld [vmem:[%s2 + $0xc8] sm:$0xff]
    %v1397 = vld [vmem:[%s2 + $0xd0] sm:$0xff]
    %v1398 = vld [vmem:[%s2 + $0xd8] sm:$0xff]
    %v1399 = vld [vmem:[%s2 + $0xe0] sm:$0xff]
    %v1400 = vld [vmem:[%s2 + $0xe8] sm:$0xff]
    %v1401 = vld [vmem:[%s2 + $0xf0] sm:$0xff]
    %v1402 = vld [vmem:[%s2 + $0xf8] sm:$0xff]
    %v1403 = vld [vmem:[%s2 + $0x100] sm:$0xff]
    %v1404 = vld [vmem:[%s2 + $0x108] sm:$0xff]
    %v1405 = vld [vmem:[%s2 + $0x110] sm:$0xff]
    %v1406 = vld [vmem:[%s2 + $0x118] sm:$0xff]
    %v1407 = vld [vmem:[%s2 + $0x120] sm:$0xff]
    %v1408 = vld [vmem:[%s2 + $0x128] sm:$0xff]
    %v1409 = vld [vmem:[%s2 + $0x130] sm:$0xff]
    %v1410 = vld [vmem:[%s2 + $0x138] sm:$0xff]
    %v1411 = vld [vmem:[%s2 + $0x140] sm:$0xff]
    %v1412 = vld [vmem:[%s2 + $0x148] sm:$0xff]
    %v1413 = vld [vmem:[%s2 + $0x150] sm:$0xff]
    %v1414 = vld [vmem:[%s2 + $0x158] sm:$0xff]
    %v1415 = vld [vmem:[%s2 + $0x160] sm:$0xff]
    %v1416 = vld [vmem:[%s2 + $0x168] sm:$0xff]
    %v1417 = vld [vmem:[%s2 + $0x170] sm:$0xff]
    %v1418 = vld [vmem:[%s2 + $0x178] sm:$0xff]
    %v1419 = vld [vmem:[%s2 + $0x180] sm:$0xff]
    %v1420 = vld [vmem:[%s2 + $0x188] sm:$0xff]
    %v1421 = vld [vmem:[%s2 + $0x190] sm:$0xff]
    %v1422 = vld [vmem:[%s2 + $0x198] sm:$0xff]
    %v1423 = vld [vmem:[%s2 + $0x1a0] sm:$0xff]
    %v1424 = vld [vmem:[%s2 + $0x1a8] sm:$0xff]
    %v1425 = vld [vmem:[%s2 + $0x1b0] sm:$0xff]
    %v1426 = vld [vmem:[%s2 + $0x1b8] sm:$0xff]
    %v1427 = vld [vmem:[%s2 + $0x1c0] sm:$0xff]
    %v1428 = vld [vmem:[%s2 + $0x1c8] sm:$0xff]
    %v1429 = vld [vmem:[%s2 + $0x1d0] sm:$0xff]
    %v1430 = vld [vmem:[%s2 + $0x1d8] sm:$0xff]
    %v1431 = vld [vmem:[%s2 + $0x1e0] sm:$0xff]
    %v1432 = vld [vmem:[%s2 + $0x1e8] sm:$0xff]
    %v1433 = vld [vmem:[%s2 + $0x1f0] sm:$0xff]
    %v1434 = vld [vmem:[%s2 + $0x1f8] sm:$0xff]
    %v1435 = vld [vmem:[%s2 + $0x200] sm:$0xff]
    %v1436 = vld [vmem:[%s2 + $0x208] sm:$0xff]
    %v1437 = vld [vmem:[%s2 + $0x210] sm:$0xff]
    %v1438 = vld [vmem:[%s2 + $0x218] sm:$0xff]
    %v1439 = vld [vmem:[%s2 + $0x220] sm:$0xff]
    %v1440 = vld [vmem:[%s2 + $0x228] sm:$0xff]
    %v1441 = vld [vmem:[%s2 + $0x230] sm:$0xff]
    %v1442 = vld [vmem:[%s2 + $0x238] sm:$0xff]
    %v1443 = vld [vmem:[%s2 + $0x240] sm:$0xff]
    %v1444 = vld [vmem:[%s2 + $0x248] sm:$0xff]
    %v1445 = vld [vmem:[%s2 + $0x250] sm:$0xff]
    %v1446 = vld [vmem:[%s2 + $0x258] sm:$0xff]
    %v1447 = vld [vmem:[%s2 + $0x260] sm:$0xff]
    %v1448 = vld [vmem:[%s2 + $0x268] sm:$0xff]
    %v1449 = vld [vmem:[%s2 + $0x270] sm:$0xff]
    %v1450 = vld [vmem:[%s2 + $0x278] sm:$0xff]
    %v1451 = vld [vmem:[%s2 + $0x280] sm:$0xff]
    %v1452 = vld [vmem:[%s2 + $0x288] sm:$0xff]
    %v1453 = vld [vmem:[%s2 + $0x290] sm:$0xff]
    %v1454 = vld [vmem:[%s2 + $0x298] sm:$0xff]
    %v1455 = vld [vmem:[%s2 + $0x2a0] sm:$0xff]
    %v1456 = vld [vmem:[%s2 + $0x2a8] sm:$0xff]
    %v1457 = vld [vmem:[%s2 + $0x2b0] sm:$0xff]
    %v1458 = vld [vmem:[%s2 + $0x2b8] sm:$0xff]
    %v1459 = vld [vmem:[%s2 + $0x2c0] sm:$0xff]
    %v1460 = vld [vmem:[%s2 + $0x2c8] sm:$0xff]
    %v1461 = vld [vmem:[%s2 + $0x2d0] sm:$0xff]
    %v1462 = vld [vmem:[%s2 + $0x2d8] sm:$0xff]
    %v1463 = vld [vmem:[%s2 + $0x2e0] sm:$0xff]
    %v1464 = vld [vmem:[%s2 + $0x2e8] sm:$0xff]
    %v1465 = vld [vmem:[%s2 + $0x2f0] sm:$0xff]
    %v1466 = vld [vmem:[%s2 + $0x2f8] sm:$0xff]
    %v1467 = vld [vmem:[%s3] sm:$0x1]
    %v1468 = vmul.f32 %v1373, %v1277
    %v1469 = vmul.f32 %v1376, %v1280
    %v1470 = vmul.f32 %v1379, %v1283
    %v1471 = vmul.f32 %v1382, %v1286
    %v1472 = vmul.f32 %v1385, %v1289
    %v1473 = vmul.f32 %v1388, %v1292
    %v1474 = vmul.f32 %v1391, %v1295
    %v1475 = vmul.f32 %v1394, %v1298
    %v1476 = vmul.f32 %v1397, %v1301
    %v1477 = vmul.f32 %v1400, %v1304
    %v1478 = vmul.f32 %v1403, %v1307
    %v1479 = vmul.f32 %v1406, %v1310
    %v1480 = vmul.f32 %v1409, %v1313
    %v1481 = vmul.f32 %v1412, %v1316
    %v1482 = vmul.f32 %v1415, %v1319
    %v1483 = vmul.f32 %v1418, %v1322
    %v1484 = vmul.f32 %v1421, %v1325
    %v1485 = vmul.f32 %v1424, %v1328
    %v1486 = vmul.f32 %v1427, %v1331
    %v1487 = vmul.f32 %v1430, %v1334
    %v1488 = vmul.f32 %v1433, %v1337
    %v1489 = vmul.f32 %v1436, %v1340
    %v1490 = vmul.f32 %v1439, %v1343
    %v1491 = vmul.f32 %v1442, %v1346
    %v1492 = vmul.f32 %v1445, %v1349
    %v1493 = vmul.f32 %v1448, %v1352
    %v1494 = vmul.f32 %v1451, %v1355
    %v1495 = vmul.f32 %v1454, %v1358
    %v1496 = vmul.f32 %v1457, %v1361
    %v1497 = vmul.f32 %v1460, %v1364
    %v1498 = vmul.f32 %v1463, %v1367
    %v1499 = vmul.f32 %v1466, %v1370
    %v1500 = vadd.f32 %v1468, 1.0
    %v1501 = vadd.f32 %v1469, 1.0
    %v1502 = vadd.f32 %v1470, 1.0
    %v1503 = vadd.f32 %v1471, 1.0
    %v1504 = vadd.f32 %v1472, 1.0
    %v1505 = vadd.f32 %v1473, 1.0
    %v1506 = vadd.f32 %v1474, 1.0
    %v1507 = vadd.f32 %v1475, 1.0
    %v1508 = vadd.f32 %v1476, 1.0
    %v1509 = vadd.f32 %v1477, 1.0
    %v1510 = vadd.f32 %v1478, 1.0
    %v1511 = vadd.f32 %v1479, 1.0
    %v1512 = vadd.f32 %v1480, 1.0
    %v1513 = vadd.f32 %v1481, 1.0
    %v1514 = vadd.f32 %v1482, 1.0
    %v1515 = vadd.f32 %v1483, 1.0
    %v1516 = vadd.f32 %v1484, 1.0
    %v1517 = vadd.f32 %v1485, 1.0
    %v1518 = vadd.f32 %v1486, 1.0
    %v1519 = vadd.f32 %v1487, 1.0
    %v1520 = vadd.f32 %v1488, 1.0
    %v1521 = vadd.f32 %v1489, 1.0
    %v1522 = vadd.f32 %v1490, 1.0
    %v1523 = vadd.f32 %v1491, 1.0
    %v1524 = vadd.f32 %v1492, 1.0
    %v1525 = vadd.f32 %v1493, 1.0
    %v1526 = vadd.f32 %v1494, 1.0
    %v1527 = vadd.f32 %v1495, 1.0
    %v1528 = vadd.f32 %v1496, 1.0
    %v1529 = vadd.f32 %v1497, 1.0
    %v1530 = vadd.f32 %v1498, 1.0
    %v1531 = vadd.f32 %v1499, 1.0
    %1533 = vset.pattern.permute.xlu0 0
    %1534 = vperm.xlu0 %1533, %v1373
    %v1535 = vpop.permute.xlu0 %1534
    %1538 = vset.pattern.permute.xlu0 0
    %1539 = vperm.xlu0 %1538, %v1376
    %v1540 = vpop.permute.xlu0 %1539
    %1543 = vset.pattern.permute.xlu0 0
    %1544 = vperm.xlu0 %1543, %v1379
    %v1545 = vpop.permute.xlu0 %1544
    %1548 = vset.pattern.permute.xlu0 0
    %1549 = vperm.xlu0 %1548, %v1382
    %v1550 = vpop.permute.xlu0 %1549
    %1553 = vset.pattern.permute.xlu0 0
    %1554 = vperm.xlu0 %1553, %v1385
    %v1555 = vpop.permute.xlu0 %1554
    %1558 = vset.pattern.permute.xlu0 0
    %1559 = vperm.xlu0 %1558, %v1388
    %v1560 = vpop.permute.xlu0 %1559
    %1563 = vset.pattern.permute.xlu0 0
    %1564 = vperm.xlu0 %1563, %v1391
    %v1565 = vpop.permute.xlu0 %1564
    %1568 = vset.pattern.permute.xlu0 0
    %1569 = vperm.xlu0 %1568, %v1394
    %v1570 = vpop.permute.xlu0 %1569
    %1573 = vset.pattern.permute.xlu0 0
    %1574 = vperm.xlu0 %1573, %v1397
    %v1575 = vpop.permute.xlu0 %1574
    %1578 = vset.pattern.permute.xlu0 0
    %1579 = vperm.xlu0 %1578, %v1400
    %v1580 = vpop.permute.xlu0 %1579
    %1583 = vset.pattern.permute.xlu0 0
    %1584 = vperm.xlu0 %1583, %v1403
    %v1585 = vpop.permute.xlu0 %1584
    %1588 = vset.pattern.permute.xlu0 0
    %1589 = vperm.xlu0 %1588, %v1406
    %v1590 = vpop.permute.xlu0 %1589
    %1593 = vset.pattern.permute.xlu0 0
    %1594 = vperm.xlu0 %1593, %v1409
    %v1595 = vpop.permute.xlu0 %1594
    %1598 = vset.pattern.permute.xlu0 0
    %1599 = vperm.xlu0 %1598, %v1412
    %v1600 = vpop.permute.xlu0 %1599
    %1603 = vset.pattern.permute.xlu0 0
    %1604 = vperm.xlu0 %1603, %v1415
    %v1605 = vpop.permute.xlu0 %1604
    %1608 = vset.pattern.permute.xlu0 0
    %1609 = vperm.xlu0 %1608, %v1418
    %v1610 = vpop.permute.xlu0 %1609
    %1613 = vset.pattern.permute.xlu0 0
    %1614 = vperm.xlu0 %1613, %v1421
    %v1615 = vpop.permute.xlu0 %1614
    %1618 = vset.pattern.permute.xlu0 0
    %1619 = vperm.xlu0 %1618, %v1424
    %v1620 = vpop.permute.xlu0 %1619
    %1623 = vset.pattern.permute.xlu0 0
    %1624 = vperm.xlu0 %1623, %v1427
    %v1625 = vpop.permute.xlu0 %1624
    %1628 = vset.pattern.permute.xlu0 0
    %1629 = vperm.xlu0 %1628, %v1430
    %v1630 = vpop.permute.xlu0 %1629
    %1633 = vset.pattern.permute.xlu0 0
    %1634 = vperm.xlu0 %1633, %v1433
    %v1635 = vpop.permute.xlu0 %1634
    %1638 = vset.pattern.permute.xlu0 0
    %1639 = vperm.xlu0 %1638, %v1436
    %v1640 = vpop.permute.xlu0 %1639
    %1643 = vset.pattern.permute.xlu0 0
    %1644 = vperm.xlu0 %1643, %v1439
    %v1645 = vpop.permute.xlu0 %1644
    %1648 = vset.pattern.permute.xlu0 0
    %1649 = vperm.xlu0 %1648, %v1442
    %v1650 = vpop.permute.xlu0 %1649
    %1653 = vset.pattern.permute.xlu0 0
    %1654 = vperm.xlu0 %1653, %v1445
    %v1655 = vpop.permute.xlu0 %1654
    %1658 = vset.pattern.permute.xlu0 0
    %1659 = vperm.xlu0 %1658, %v1448
    %v1660 = vpop.permute.xlu0 %1659
    %1663 = vset.pattern.permute.xlu0 0
    %1664 = vperm.xlu0 %1663, %v1451
    %v1665 = vpop.permute.xlu0 %1664
    %1668 = vset.pattern.permute.xlu0 0
    %1669 = vperm.xlu0 %1668, %v1454
    %v1670 = vpop.permute.xlu0 %1669
    %1673 = vset.pattern.permute.xlu0 0
    %1674 = vperm.xlu0 %1673, %v1457
    %v1675 = vpop.permute.xlu0 %1674
    %1678 = vset.pattern.permute.xlu0 0
    %1679 = vperm.xlu0 %1678, %v1460
    %v1680 = vpop.permute.xlu0 %1679
    %1683 = vset.pattern.permute.xlu0 0
    %1684 = vperm.xlu0 %1683, %v1463
    %v1685 = vpop.permute.xlu0 %1684
    %1688 = vset.pattern.permute.xlu0 0
    %1689 = vperm.xlu0 %1688, %v1466
    %v1690 = vpop.permute.xlu0 %1689
    %v1692 = vmul.f32 %v1535, %v1275
    %v1693 = vmul.f32 %v1540, %v1278
    %v1694 = vmul.f32 %v1545, %v1281
    %v1695 = vmul.f32 %v1550, %v1284
    %v1696 = vmul.f32 %v1555, %v1287
    %v1697 = vmul.f32 %v1560, %v1290
    %v1698 = vmul.f32 %v1565, %v1293
    %v1699 = vmul.f32 %v1570, %v1296
    %v1700 = vmul.f32 %v1575, %v1299
    %v1701 = vmul.f32 %v1580, %v1302
    %v1702 = vmul.f32 %v1585, %v1305
    %v1703 = vmul.f32 %v1590, %v1308
    %v1704 = vmul.f32 %v1595, %v1311
    %v1705 = vmul.f32 %v1600, %v1314
    %v1706 = vmul.f32 %v1605, %v1317
    %v1707 = vmul.f32 %v1610, %v1320
    %v1708 = vmul.f32 %v1615, %v1323
    %v1709 = vmul.f32 %v1620, %v1326
    %v1710 = vmul.f32 %v1625, %v1329
    %v1711 = vmul.f32 %v1630, %v1332
    %v1712 = vmul.f32 %v1635, %v1335
    %v1713 = vmul.f32 %v1640, %v1338
    %v1714 = vmul.f32 %v1645, %v1341
    %v1715 = vmul.f32 %v1650, %v1344
    %v1716 = vmul.f32 %v1655, %v1347
    %v1717 = vmul.f32 %v1660, %v1350
    %v1718 = vmul.f32 %v1665, %v1353
    %v1719 = vmul.f32 %v1670, %v1356
    %v1720 = vmul.f32 %v1675, %v1359
    %v1721 = vmul.f32 %v1680, %v1362
    %v1722 = vmul.f32 %v1685, %v1365
    %v1723 = vmul.f32 %v1690, %v1368
    %v1724 = vadd.f32 %v1692, %v1371
    %v1725 = vadd.f32 %v1693, %v1374
    %v1726 = vadd.f32 %v1694, %v1377
    %v1727 = vadd.f32 %v1695, %v1380
    %v1728 = vadd.f32 %v1696, %v1383
    %v1729 = vadd.f32 %v1697, %v1386
    %v1730 = vadd.f32 %v1698, %v1389
    %v1731 = vadd.f32 %v1699, %v1392
    %v1732 = vadd.f32 %v1700, %v1395
    %v1733 = vadd.f32 %v1701, %v1398
    %v1734 = vadd.f32 %v1702, %v1401
    %v1735 = vadd.f32 %v1703, %v1404
    %v1736 = vadd.f32 %v1704, %v1407
    %v1737 = vadd.f32 %v1705, %v1410
    %v1738 = vadd.f32 %v1706, %v1413
    %v1739 = vadd.f32 %v1707, %v1416
    %v1740 = vadd.f32 %v1708, %v1419
    %v1741 = vadd.f32 %v1709, %v1422
    %v1742 = vadd.f32 %v1710, %v1425
    %v1743 = vadd.f32 %v1711, %v1428
    %v1744 = vadd.f32 %v1712, %v1431
    %v1745 = vadd.f32 %v1713, %v1434
    %v1746 = vadd.f32 %v1714, %v1437
    %v1747 = vadd.f32 %v1715, %v1440
    %v1748 = vadd.f32 %v1716, %v1443
    %v1749 = vadd.f32 %v1717, %v1446
    %v1750 = vadd.f32 %v1718, %v1449
    %v1751 = vadd.f32 %v1719, %v1452
    %v1752 = vadd.f32 %v1720, %v1455
    %v1753 = vadd.f32 %v1721, %v1458
    %v1754 = vadd.f32 %v1722, %v1461
    %v1755 = vadd.f32 %v1723, %v1464
    %1756 = vset.pattern.permute.xlu0 1
    %1757 = vperm.xlu0 %1756, %v1373
    %v1758 = vpop.permute.xlu0 %1757
    %1760 = vset.pattern.permute.xlu0 1
    %1761 = vperm.xlu0 %1760, %v1376
    %v1762 = vpop.permute.xlu0 %1761
    %1764 = vset.pattern.permute.xlu0 1
    %1765 = vperm.xlu0 %1764, %v1379
    %v1766 = vpop.permute.xlu0 %1765
    %1768 = vset.pattern.permute.xlu0 1
    %1769 = vperm.xlu0 %1768, %v1382
    %v1770 = vpop.permute.xlu0 %1769
    %1772 = vset.pattern.permute.xlu0 1
    %1773 = vperm.xlu0 %1772, %v1385
    %v1774 = vpop.permute.xlu0 %1773
    %1776 = vset.pattern.permute.xlu0 1
    %1777 = vperm.xlu0 %1776, %v1388
    %v1778 = vpop.permute.xlu0 %1777
    %1780 = vset.pattern.permute.xlu0 1
    %1781 = vperm.xlu0 %1780, %v1391
    %v1782 = vpop.permute.xlu0 %1781
    %1784 = vset.pattern.permute.xlu0 1
    %1785 = vperm.xlu0 %1784, %v1394
    %v1786 = vpop.permute.xlu0 %1785
    %1788 = vset.pattern.permute.xlu0 1
    %1789 = vperm.xlu0 %1788, %v1397
    %v1790 = vpop.permute.xlu0 %1789
    %1792 = vset.pattern.permute.xlu0 1
    %1793 = vperm.xlu0 %1792, %v1400
    %v1794 = vpop.permute.xlu0 %1793
    %1796 = vset.pattern.permute.xlu0 1
    %1797 = vperm.xlu0 %1796, %v1403
    %v1798 = vpop.permute.xlu0 %1797
    %1800 = vset.pattern.permute.xlu0 1
    %1801 = vperm.xlu0 %1800, %v1406
    %v1802 = vpop.permute.xlu0 %1801
    %1804 = vset.pattern.permute.xlu0 1
    %1805 = vperm.xlu0 %1804, %v1409
    %v1806 = vpop.permute.xlu0 %1805
    %1808 = vset.pattern.permute.xlu0 1
    %1809 = vperm.xlu0 %1808, %v1412
    %v1810 = vpop.permute.xlu0 %1809
    %1812 = vset.pattern.permute.xlu0 1
    %1813 = vperm.xlu0 %1812, %v1415
    %v1814 = vpop.permute.xlu0 %1813
    %1816 = vset.pattern.permute.xlu0 1
    %1817 = vperm.xlu0 %1816, %v1418
    %v1818 = vpop.permute.xlu0 %1817
    %1820 = vset.pattern.permute.xlu0 1
    %1821 = vperm.xlu0 %1820, %v1421
    %v1822 = vpop.permute.xlu0 %1821
    %1824 = vset.pattern.permute.xlu0 1
    %1825 = vperm.xlu0 %1824, %v1424
    %v1826 = vpop.permute.xlu0 %1825
    %1828 = vset.pattern.permute.xlu0 1
    %1829 = vperm.xlu0 %1828, %v1427
    %v1830 = vpop.permute.xlu0 %1829
    %1832 = vset.pattern.permute.xlu0 1
    %1833 = vperm.xlu0 %1832, %v1430
    %v1834 = vpop.permute.xlu0 %1833
    %1836 = vset.pattern.permute.xlu0 1
    %1837 = vperm.xlu0 %1836, %v1433
    %v1838 = vpop.permute.xlu0 %1837
    %1840 = vset.pattern.permute.xlu0 1
    %1841 = vperm.xlu0 %1840, %v1436
    %v1842 = vpop.permute.xlu0 %1841
    %1844 = vset.pattern.permute.xlu0 1
    %1845 = vperm.xlu0 %1844, %v1439
    %v1846 = vpop.permute.xlu0 %1845
    %1848 = vset.pattern.permute.xlu0 1
    %1849 = vperm.xlu0 %1848, %v1442
    %v1850 = vpop.permute.xlu0 %1849
    %1852 = vset.pattern.permute.xlu0 1
    %1853 = vperm.xlu0 %1852, %v1445
    %v1854 = vpop.permute.xlu0 %1853
    %1856 = vset.pattern.permute.xlu0 1
    %1857 = vperm.xlu0 %1856, %v1448
    %v1858 = vpop.permute.xlu0 %1857
    %1860 = vset.pattern.permute.xlu0 1
    %1861 = vperm.xlu0 %1860, %v1451
    %v1862 = vpop.permute.xlu0 %1861
    %1864 = vset.pattern.permute.xlu0 1
    %1865 = vperm.xlu0 %1864, %v1454
    %v1866 = vpop.permute.xlu0 %1865
    %1868 = vset.pattern.permute.xlu0 1
    %1869 = vperm.xlu0 %1868, %v1457
    %v1870 = vpop.permute.xlu0 %1869
    %1872 = vset.pattern.permute.xlu0 1
    %1873 = vperm.xlu0 %1872, %v1460
    %v1874 = vpop.permute.xlu0 %1873
    %1876 = vset.pattern.permute.xlu0 1
    %1877 = vperm.xlu0 %1876, %v1463
    %v1878 = vpop.permute.xlu0 %1877
    %1880 = vset.pattern.permute.xlu0 1
    %1881 = vperm.xlu0 %1880, %v1466
    %v1882 = vpop.permute.xlu0 %1881
    %v1884 = vmul.f32 %v1758, %v1276
    %v1885 = vmul.f32 %v1762, %v1279
    %v1886 = vmul.f32 %v1766, %v1282
    %v1887 = vmul.f32 %v1770, %v1285
    %v1888 = vmul.f32 %v1774, %v1288
    %v1889 = vmul.f32 %v1778, %v1291
    %v1890 = vmul.f32 %v1782, %v1294
    %v1891 = vmul.f32 %v1786, %v1297
    %v1892 = vmul.f32 %v1790, %v1300
    %v1893 = vmul.f32 %v1794, %v1303
    %v1894 = vmul.f32 %v1798, %v1306
    %v1895 = vmul.f32 %v1802, %v1309
    %v1896 = vmul.f32 %v1806, %v1312
    %v1897 = vmul.f32 %v1810, %v1315
    %v1898 = vmul.f32 %v1814, %v1318
    %v1899 = vmul.f32 %v1818, %v1321
    %v1900 = vmul.f32 %v1822, %v1324
    %v1901 = vmul.f32 %v1826, %v1327
    %v1902 = vmul.f32 %v1830, %v1330
    %v1903 = vmul.f32 %v1834, %v1333
    %v1904 = vmul.f32 %v1838, %v1336
    %v1905 = vmul.f32 %v1842, %v1339
    %v1906 = vmul.f32 %v1846, %v1342
    %v1907 = vmul.f32 %v1850, %v1345
    %v1908 = vmul.f32 %v1854, %v1348
    %v1909 = vmul.f32 %v1858, %v1351
    %v1910 = vmul.f32 %v1862, %v1354
    %v1911 = vmul.f32 %v1866, %v1357
    %v1912 = vmul.f32 %v1870, %v1360
    %v1913 = vmul.f32 %v1874, %v1363
    %v1914 = vmul.f32 %v1878, %v1366
    %v1915 = vmul.f32 %v1882, %v1369
    %v1916 = vadd.f32 %v1884, %v1372
    %v1917 = vadd.f32 %v1885, %v1375
    %v1918 = vadd.f32 %v1886, %v1378
    %v1919 = vadd.f32 %v1887, %v1381
    %v1920 = vadd.f32 %v1888, %v1384
    %v1921 = vadd.f32 %v1889, %v1387
    %v1922 = vadd.f32 %v1890, %v1390
    %v1923 = vadd.f32 %v1891, %v1393
    %v1924 = vadd.f32 %v1892, %v1396
    %v1925 = vadd.f32 %v1893, %v1399
    %v1926 = vadd.f32 %v1894, %v1402
    %v1927 = vadd.f32 %v1895, %v1405
    %v1928 = vadd.f32 %v1896, %v1408
    %v1929 = vadd.f32 %v1897, %v1411
    %v1930 = vadd.f32 %v1898, %v1414
    %v1931 = vadd.f32 %v1899, %v1417
    %v1932 = vadd.f32 %v1900, %v1420
    %v1933 = vadd.f32 %v1901, %v1423
    %v1934 = vadd.f32 %v1902, %v1426
    %v1935 = vadd.f32 %v1903, %v1429
    %v1936 = vadd.f32 %v1904, %v1432
    %v1937 = vadd.f32 %v1905, %v1435
    %v1938 = vadd.f32 %v1906, %v1438
    %v1939 = vadd.f32 %v1907, %v1441
    %v1940 = vadd.f32 %v1908, %v1444
    %v1941 = vadd.f32 %v1909, %v1447
    %v1942 = vadd.f32 %v1910, %v1450
    %v1943 = vadd.f32 %v1911, %v1453
    %v1944 = vadd.f32 %v1912, %v1456
    %v1945 = vadd.f32 %v1913, %v1459
    %v1946 = vadd.f32 %v1914, %v1462
    %v1947 = vadd.f32 %v1915, %v1465
    %1949 = vset.pattern.permute.xlu0 0
    %1950 = vperm.xlu0 %1949, %v1500
    %v1951 = vpop.permute.xlu0 %1950
    %1954 = vset.pattern.permute.xlu0 0
    %1955 = vperm.xlu0 %1954, %v1501
    %v1956 = vpop.permute.xlu0 %1955
    %1959 = vset.pattern.permute.xlu0 0
    %1960 = vperm.xlu0 %1959, %v1502
    %v1961 = vpop.permute.xlu0 %1960
    %1964 = vset.pattern.permute.xlu0 0
    %1965 = vperm.xlu0 %1964, %v1503
    %v1966 = vpop.permute.xlu0 %1965
    %1969 = vset.pattern.permute.xlu0 0
    %1970 = vperm.xlu0 %1969, %v1504
    %v1971 = vpop.permute.xlu0 %1970
    %1974 = vset.pattern.permute.xlu0 0
    %1975 = vperm.xlu0 %1974, %v1505
    %v1976 = vpop.permute.xlu0 %1975
    %1979 = vset.pattern.permute.xlu0 0
    %1980 = vperm.xlu0 %1979, %v1506
    %v1981 = vpop.permute.xlu0 %1980
    %1984 = vset.pattern.permute.xlu0 0
    %1985 = vperm.xlu0 %1984, %v1507
    %v1986 = vpop.permute.xlu0 %1985
    %1989 = vset.pattern.permute.xlu0 0
    %1990 = vperm.xlu0 %1989, %v1508
    %v1991 = vpop.permute.xlu0 %1990
    %1994 = vset.pattern.permute.xlu0 0
    %1995 = vperm.xlu0 %1994, %v1509
    %v1996 = vpop.permute.xlu0 %1995
    %1999 = vset.pattern.permute.xlu0 0
    %2000 = vperm.xlu0 %1999, %v1510
    %v2001 = vpop.permute.xlu0 %2000
    %2004 = vset.pattern.permute.xlu0 0
    %2005 = vperm.xlu0 %2004, %v1511
    %v2006 = vpop.permute.xlu0 %2005
    %2009 = vset.pattern.permute.xlu0 0
    %2010 = vperm.xlu0 %2009, %v1512
    %v2011 = vpop.permute.xlu0 %2010
    %2014 = vset.pattern.permute.xlu0 0
    %2015 = vperm.xlu0 %2014, %v1513
    %v2016 = vpop.permute.xlu0 %2015
    %2019 = vset.pattern.permute.xlu0 0
    %2020 = vperm.xlu0 %2019, %v1514
    %v2021 = vpop.permute.xlu0 %2020
    %2024 = vset.pattern.permute.xlu0 0
    %2025 = vperm.xlu0 %2024, %v1515
    %v2026 = vpop.permute.xlu0 %2025
    %2029 = vset.pattern.permute.xlu0 0
    %2030 = vperm.xlu0 %2029, %v1516
    %v2031 = vpop.permute.xlu0 %2030
    %2034 = vset.pattern.permute.xlu0 0
    %2035 = vperm.xlu0 %2034, %v1517
    %v2036 = vpop.permute.xlu0 %2035
    %2039 = vset.pattern.permute.xlu0 0
    %2040 = vperm.xlu0 %2039, %v1518
    %v2041 = vpop.permute.xlu0 %2040
    %2044 = vset.pattern.permute.xlu0 0
    %2045 = vperm.xlu0 %2044, %v1519
    %v2046 = vpop.permute.xlu0 %2045
    %2049 = vset.pattern.permute.xlu0 0
    %2050 = vperm.xlu0 %2049, %v1520
    %v2051 = vpop.permute.xlu0 %2050
    %2054 = vset.pattern.permute.xlu0 0
    %2055 = vperm.xlu0 %2054, %v1521
    %v2056 = vpop.permute.xlu0 %2055
    %2059 = vset.pattern.permute.xlu0 0
    %2060 = vperm.xlu0 %2059, %v1522
    %v2061 = vpop.permute.xlu0 %2060
    %2064 = vset.pattern.permute.xlu0 0
    %2065 = vperm.xlu0 %2064, %v1523
    %v2066 = vpop.permute.xlu0 %2065
    %2069 = vset.pattern.permute.xlu0 0
    %2070 = vperm.xlu0 %2069, %v1524
    %v2071 = vpop.permute.xlu0 %2070
    %2074 = vset.pattern.permute.xlu0 0
    %2075 = vperm.xlu0 %2074, %v1525
    %v2076 = vpop.permute.xlu0 %2075
    %2079 = vset.pattern.permute.xlu0 0
    %2080 = vperm.xlu0 %2079, %v1526
    %v2081 = vpop.permute.xlu0 %2080
    %2084 = vset.pattern.permute.xlu0 0
    %2085 = vperm.xlu0 %2084, %v1527
    %v2086 = vpop.permute.xlu0 %2085
    %2089 = vset.pattern.permute.xlu0 0
    %2090 = vperm.xlu0 %2089, %v1528
    %v2091 = vpop.permute.xlu0 %2090
    %2094 = vset.pattern.permute.xlu0 0
    %2095 = vperm.xlu0 %2094, %v1529
    %v2096 = vpop.permute.xlu0 %2095
    %2099 = vset.pattern.permute.xlu0 0
    %2100 = vperm.xlu0 %2099, %v1530
    %v2101 = vpop.permute.xlu0 %2100
    %2104 = vset.pattern.permute.xlu0 0
    %2105 = vperm.xlu0 %2104, %v1531
    %v2106 = vpop.permute.xlu0 %2105
    %v2108 = vrcp.pop %v1951
    %v2109 = vmul.f32 %v1724, %v2108
    %v2110 = vrcp.pop %v1956
    %v2111 = vmul.f32 %v1725, %v2110
    %v2112 = vrcp.pop %v1961
    %v2113 = vmul.f32 %v1726, %v2112
    %v2114 = vrcp.pop %v1966
    %v2115 = vmul.f32 %v1727, %v2114
    %v2116 = vrcp.pop %v1971
    %v2117 = vmul.f32 %v1728, %v2116
    %v2118 = vrcp.pop %v1976
    %v2119 = vmul.f32 %v1729, %v2118
    %v2120 = vrcp.pop %v1981
    %v2121 = vmul.f32 %v1730, %v2120
    %v2122 = vrcp.pop %v1986
    %v2123 = vmul.f32 %v1731, %v2122
    %v2124 = vrcp.pop %v1991
    %v2125 = vmul.f32 %v1732, %v2124
    %v2126 = vrcp.pop %v1996
    %v2127 = vmul.f32 %v1733, %v2126
    %v2128 = vrcp.pop %v2001
    %v2129 = vmul.f32 %v1734, %v2128
    %v2130 = vrcp.pop %v2006
    %v2131 = vmul.f32 %v1735, %v2130
    %v2132 = vrcp.pop %v2011
    %v2133 = vmul.f32 %v1736, %v2132
    %v2134 = vrcp.pop %v2016
    %v2135 = vmul.f32 %v1737, %v2134
    %v2136 = vrcp.pop %v2021
    %v2137 = vmul.f32 %v1738, %v2136
    %v2138 = vrcp.pop %v2026
    %v2139 = vmul.f32 %v1739, %v2138
    %v2140 = vrcp.pop %v2031
    %v2141 = vmul.f32 %v1740, %v2140
    %v2142 = vrcp.pop %v2036
    %v2143 = vmul.f32 %v1741, %v2142
    %v2144 = vrcp.pop %v2041
    %v2145 = vmul.f32 %v1742, %v2144
    %v2146 = vrcp.pop %v2046
    %v2147 = vmul.f32 %v1743, %v2146
    %v2148 = vrcp.pop %v2051
    %v2149 = vmul.f32 %v1744, %v2148
    %v2150 = vrcp.pop %v2056
    %v2151 = vmul.f32 %v1745, %v2150
    %v2152 = vrcp.pop %v2061
    %v2153 = vmul.f32 %v1746, %v2152
    %v2154 = vrcp.pop %v2066
    %v2155 = vmul.f32 %v1747, %v2154
    %v2156 = vrcp.pop %v2071
    %v2157 = vmul.f32 %v1748, %v2156
    %v2158 = vrcp.pop %v2076
    %v2159 = vmul.f32 %v1749, %v2158
    %v2160 = vrcp.pop %v2081
    %v2161 = vmul.f32 %v1750, %v2160
    %v2162 = vrcp.pop %v2086
    %v2163 = vmul.f32 %v1751, %v2162
    %v2164 = vrcp.pop %v2091
    %v2165 = vmul.f32 %v1752, %v2164
    %v2166 = vrcp.pop %v2096
    %v2167 = vmul.f32 %v1753, %v2166
    %v2168 = vrcp.pop %v2101
    %v2169 = vmul.f32 %v1754, %v2168
    %v2170 = vrcp.pop %v2106
    %v2171 = vmul.f32 %v1755, %v2170
    %v2173 = vlaneseq
    %v2174 = vshrl.u32 %v2173, 7
    %v2175 = vsub.s32 0, %v2174
    %v2176 = vrot.slane %v1467, %v2175
    %v2178 = vadd.f32 %v2109, %v2176
    %v2179 = vadd.f32 %v2111, %v2176
    %v2180 = vadd.f32 %v2113, %v2176
    %v2181 = vadd.f32 %v2115, %v2176
    %v2182 = vadd.f32 %v2117, %v2176
    %v2183 = vadd.f32 %v2119, %v2176
    %v2184 = vadd.f32 %v2121, %v2176
    %v2185 = vadd.f32 %v2123, %v2176
    %v2186 = vadd.f32 %v2125, %v2176
    %v2187 = vadd.f32 %v2127, %v2176
    %v2188 = vadd.f32 %v2129, %v2176
    %v2189 = vadd.f32 %v2131, %v2176
    %v2190 = vadd.f32 %v2133, %v2176
    %v2191 = vadd.f32 %v2135, %v2176
    %v2192 = vadd.f32 %v2137, %v2176
    %v2193 = vadd.f32 %v2139, %v2176
    %v2194 = vadd.f32 %v2141, %v2176
    %v2195 = vadd.f32 %v2143, %v2176
    %v2196 = vadd.f32 %v2145, %v2176
    %v2197 = vadd.f32 %v2147, %v2176
    %v2198 = vadd.f32 %v2149, %v2176
    %v2199 = vadd.f32 %v2151, %v2176
    %v2200 = vadd.f32 %v2153, %v2176
    %v2201 = vadd.f32 %v2155, %v2176
    %v2202 = vadd.f32 %v2157, %v2176
    %v2203 = vadd.f32 %v2159, %v2176
    %v2204 = vadd.f32 %v2161, %v2176
    %v2205 = vadd.f32 %v2163, %v2176
    %v2206 = vadd.f32 %v2165, %v2176
    %v2207 = vadd.f32 %v2167, %v2176
    %v2208 = vadd.f32 %v2169, %v2176
    %v2209 = vadd.f32 %v2171, %v2176
    %v2210 = vmax.f32 %v2178, 0.0
    %v2211 = vmax.f32 %v2179, 0.0
    %v2212 = vmax.f32 %v2180, 0.0
    %v2213 = vmax.f32 %v2181, 0.0
    %v2214 = vmax.f32 %v2182, 0.0
    %v2215 = vmax.f32 %v2183, 0.0
    %v2216 = vmax.f32 %v2184, 0.0
    %v2217 = vmax.f32 %v2185, 0.0
    %v2218 = vmax.f32 %v2186, 0.0
    %v2219 = vmax.f32 %v2187, 0.0
    %v2220 = vmax.f32 %v2188, 0.0
    %v2221 = vmax.f32 %v2189, 0.0
    %v2222 = vmax.f32 %v2190, 0.0
    %v2223 = vmax.f32 %v2191, 0.0
    %v2224 = vmax.f32 %v2192, 0.0
    %v2225 = vmax.f32 %v2193, 0.0
    %v2226 = vmax.f32 %v2194, 0.0
    %v2227 = vmax.f32 %v2195, 0.0
    %v2228 = vmax.f32 %v2196, 0.0
    %v2229 = vmax.f32 %v2197, 0.0
    %v2230 = vmax.f32 %v2198, 0.0
    %v2231 = vmax.f32 %v2199, 0.0
    %v2232 = vmax.f32 %v2200, 0.0
    %v2233 = vmax.f32 %v2201, 0.0
    %v2234 = vmax.f32 %v2202, 0.0
    %v2235 = vmax.f32 %v2203, 0.0
    %v2236 = vmax.f32 %v2204, 0.0
    %v2237 = vmax.f32 %v2205, 0.0
    %v2238 = vmax.f32 %v2206, 0.0
    %v2239 = vmax.f32 %v2207, 0.0
    %v2240 = vmax.f32 %v2208, 0.0
    %v2241 = vmax.f32 %v2209, 0.0
    %2242 = vst [vmem:[%s4] sm:$0xff] %v2210
    %2243 = vst [vmem:[%s4 + $0x10] sm:$0xff] %v2211
    %2244 = vst [vmem:[%s4 + $0x20] sm:$0xff] %v2212
    %2245 = vst [vmem:[%s4 + $0x30] sm:$0xff] %v2213
    %2246 = vst [vmem:[%s4 + $0x40] sm:$0xff] %v2214
    %2247 = vst [vmem:[%s4 + $0x50] sm:$0xff] %v2215
    %2248 = vst [vmem:[%s4 + $0x60] sm:$0xff] %v2216
    %2249 = vst [vmem:[%s4 + $0x70] sm:$0xff] %v2217
    %2250 = vst [vmem:[%s4 + $0x80] sm:$0xff] %v2218
    %2251 = vst [vmem:[%s4 + $0x90] sm:$0xff] %v2219
    %2252 = vst [vmem:[%s4 + $0xa0] sm:$0xff] %v2220
    %2253 = vst [vmem:[%s4 + $0xb0] sm:$0xff] %v2221
    %2254 = vst [vmem:[%s4 + $0xc0] sm:$0xff] %v2222
    %2255 = vst [vmem:[%s4 + $0xd0] sm:$0xff] %v2223
    %2256 = vst [vmem:[%s4 + $0xe0] sm:$0xff] %v2224
    %2257 = vst [vmem:[%s4 + $0xf0] sm:$0xff] %v2225
    %2258 = vst [vmem:[%s4 + $0x100] sm:$0xff] %v2226
    %2259 = vst [vmem:[%s4 + $0x110] sm:$0xff] %v2227
    %2260 = vst [vmem:[%s4 + $0x120] sm:$0xff] %v2228
    %2261 = vst [vmem:[%s4 + $0x130] sm:$0xff] %v2229
    %2262 = vst [vmem:[%s4 + $0x140] sm:$0xff] %v2230
    %2263 = vst [vmem:[%s4 + $0x150] sm:$0xff] %v2231
    %2264 = vst [vmem:[%s4 + $0x160] sm:$0xff] %v2232
    %2265 = vst [vmem:[%s4 + $0x170] sm:$0xff] %v2233
    %2266 = vst [vmem:[%s4 + $0x180] sm:$0xff] %v2234
    %2267 = vst [vmem:[%s4 + $0x190] sm:$0xff] %v2235
    %2268 = vst [vmem:[%s4 + $0x1a0] sm:$0xff] %v2236
    %2269 = vst [vmem:[%s4 + $0x1b0] sm:$0xff] %v2237
    %2270 = vst [vmem:[%s4 + $0x1c0] sm:$0xff] %v2238
    %2271 = vst [vmem:[%s4 + $0x1d0] sm:$0xff] %v2239
    %2272 = vst [vmem:[%s4 + $0x1e0] sm:$0xff] %v2240
    %2273 = vst [vmem:[%s4 + $0x1f0] sm:$0xff] %v2241
    %2274 = vset.pattern.permute.xlu0 1
    %2275 = vperm.xlu0 %2274, %v1500
    %v2276 = vpop.permute.xlu0 %2275
    %2278 = vset.pattern.permute.xlu0 1
    %2279 = vperm.xlu0 %2278, %v1501
    %v2280 = vpop.permute.xlu0 %2279
    %2282 = vset.pattern.permute.xlu0 1
    %2283 = vperm.xlu0 %2282, %v1502
    %v2284 = vpop.permute.xlu0 %2283
    %2286 = vset.pattern.permute.xlu0 1
    %2287 = vperm.xlu0 %2286, %v1503
    %v2288 = vpop.permute.xlu0 %2287
    %2290 = vset.pattern.permute.xlu0 1
    %2291 = vperm.xlu0 %2290, %v1504
    %v2292 = vpop.permute.xlu0 %2291
    %2294 = vset.pattern.permute.xlu0 1
    %2295 = vperm.xlu0 %2294, %v1505
    %v2296 = vpop.permute.xlu0 %2295
    %2298 = vset.pattern.permute.xlu0 1
    %2299 = vperm.xlu0 %2298, %v1506
    %v2300 = vpop.permute.xlu0 %2299
    %2302 = vset.pattern.permute.xlu0 1
    %2303 = vperm.xlu0 %2302, %v1507
    %v2304 = vpop.permute.xlu0 %2303
    %2306 = vset.pattern.permute.xlu0 1
    %2307 = vperm.xlu0 %2306, %v1508
    %v2308 = vpop.permute.xlu0 %2307
    %2310 = vset.pattern.permute.xlu0 1
    %2311 = vperm.xlu0 %2310, %v1509
    %v2312 = vpop.permute.xlu0 %2311
    %2314 = vset.pattern.permute.xlu0 1
    %2315 = vperm.xlu0 %2314, %v1510
    %v2316 = vpop.permute.xlu0 %2315
    %2318 = vset.pattern.permute.xlu0 1
    %2319 = vperm.xlu0 %2318, %v1511
    %v2320 = vpop.permute.xlu0 %2319
    %2322 = vset.pattern.permute.xlu0 1
    %2323 = vperm.xlu0 %2322, %v1512
    %v2324 = vpop.permute.xlu0 %2323
    %2326 = vset.pattern.permute.xlu0 1
    %2327 = vperm.xlu0 %2326, %v1513
    %v2328 = vpop.permute.xlu0 %2327
    %2330 = vset.pattern.permute.xlu0 1
    %2331 = vperm.xlu0 %2330, %v1514
    %v2332 = vpop.permute.xlu0 %2331
    %2334 = vset.pattern.permute.xlu0 1
    %2335 = vperm.xlu0 %2334, %v1515
    %v2336 = vpop.permute.xlu0 %2335
    %2338 = vset.pattern.permute.xlu0 1
    %2339 = vperm.xlu0 %2338, %v1516
    %v2340 = vpop.permute.xlu0 %2339
    %2342 = vset.pattern.permute.xlu0 1
    %2343 = vperm.xlu0 %2342, %v1517
    %v2344 = vpop.permute.xlu0 %2343
    %2346 = vset.pattern.permute.xlu0 1
    %2347 = vperm.xlu0 %2346, %v1518
    %v2348 = vpop.permute.xlu0 %2347
    %2350 = vset.pattern.permute.xlu0 1
    %2351 = vperm.xlu0 %2350, %v1519
    %v2352 = vpop.permute.xlu0 %2351
    %2354 = vset.pattern.permute.xlu0 1
    %2355 = vperm.xlu0 %2354, %v1520
    %v2356 = vpop.permute.xlu0 %2355
    %2358 = vset.pattern.permute.xlu0 1
    %2359 = vperm.xlu0 %2358, %v1521
    %v2360 = vpop.permute.xlu0 %2359
    %2362 = vset.pattern.permute.xlu0 1
    %2363 = vperm.xlu0 %2362, %v1522
    %v2364 = vpop.permute.xlu0 %2363
    %2366 = vset.pattern.permute.xlu0 1
    %2367 = vperm.xlu0 %2366, %v1523
    %v2368 = vpop.permute.xlu0 %2367
    %2370 = vset.pattern.permute.xlu0 1
    %2371 = vperm.xlu0 %2370, %v1524
    %v2372 = vpop.permute.xlu0 %2371
    %2374 = vset.pattern.permute.xlu0 1
    %2375 = vperm.xlu0 %2374, %v1525
    %v2376 = vpop.permute.xlu0 %2375
    %2378 = vset.pattern.permute.xlu0 1
    %2379 = vperm.xlu0 %2378, %v1526
    %v2380 = vpop.permute.xlu0 %2379
    %2382 = vset.pattern.permute.xlu0 1
    %2383 = vperm.xlu0 %2382, %v1527
    %v2384 = vpop.permute.xlu0 %2383
    %2386 = vset.pattern.permute.xlu0 1
    %2387 = vperm.xlu0 %2386, %v1528
    %v2388 = vpop.permute.xlu0 %2387
    %2390 = vset.pattern.permute.xlu0 1
    %2391 = vperm.xlu0 %2390, %v1529
    %v2392 = vpop.permute.xlu0 %2391
    %2394 = vset.pattern.permute.xlu0 1
    %2395 = vperm.xlu0 %2394, %v1530
    %v2396 = vpop.permute.xlu0 %2395
    %2398 = vset.pattern.permute.xlu0 1
    %2399 = vperm.xlu0 %2398, %v1531
    %v2400 = vpop.permute.xlu0 %2399
    %v2402 = vrcp.pop %v2276
    %v2403 = vmul.f32 %v1916, %v2402
    %v2404 = vrcp.pop %v2280
    %v2405 = vmul.f32 %v1917, %v2404
    %v2406 = vrcp.pop %v2284
    %v2407 = vmul.f32 %v1918, %v2406
    %v2408 = vrcp.pop %v2288
    %v2409 = vmul.f32 %v1919, %v2408
    %v2410 = vrcp.pop %v2292
    %v2411 = vmul.f32 %v1920, %v2410
    %v2412 = vrcp.pop %v2296
    %v2413 = vmul.f32 %v1921, %v2412
    %v2414 = vrcp.pop %v2300
    %v2415 = vmul.f32 %v1922, %v2414
    %v2416 = vrcp.pop %v2304
    %v2417 = vmul.f32 %v1923, %v2416
    %v2418 = vrcp.pop %v2308
    %v2419 = vmul.f32 %v1924, %v2418
    %v2420 = vrcp.pop %v2312
    %v2421 = vmul.f32 %v1925, %v2420
    %v2422 = vrcp.pop %v2316
    %v2423 = vmul.f32 %v1926, %v2422
    %v2424 = vrcp.pop %v2320
    %v2425 = vmul.f32 %v1927, %v2424
    %v2426 = vrcp.pop %v2324
    %v2427 = vmul.f32 %v1928, %v2426
    %v2428 = vrcp.pop %v2328
    %v2429 = vmul.f32 %v1929, %v2428
    %v2430 = vrcp.pop %v2332
    %v2431 = vmul.f32 %v1930, %v2430
    %v2432 = vrcp.pop %v2336
    %v2433 = vmul.f32 %v1931, %v2432
    %v2434 = vrcp.pop %v2340
    %v2435 = vmul.f32 %v1932, %v2434
    %v2436 = vrcp.pop %v2344
    %v2437 = vmul.f32 %v1933, %v2436
    %v2438 = vrcp.pop %v2348
    %v2439 = vmul.f32 %v1934, %v2438
    %v2440 = vrcp.pop %v2352
    %v2441 = vmul.f32 %v1935, %v2440
    %v2442 = vrcp.pop %v2356
    %v2443 = vmul.f32 %v1936, %v2442
    %v2444 = vrcp.pop %v2360
    %v2445 = vmul.f32 %v1937, %v2444
    %v2446 = vrcp.pop %v2364
    %v2447 = vmul.f32 %v1938, %v2446
    %v2448 = vrcp.pop %v2368
    %v2449 = vmul.f32 %v1939, %v2448
    %v2450 = vrcp.pop %v2372
    %v2451 = vmul.f32 %v1940, %v2450
    %v2452 = vrcp.pop %v2376
    %v2453 = vmul.f32 %v1941, %v2452
    %v2454 = vrcp.pop %v2380
    %v2455 = vmul.f32 %v1942, %v2454
    %v2456 = vrcp.pop %v2384
    %v2457 = vmul.f32 %v1943, %v2456
    %v2458 = vrcp.pop %v2388
    %v2459 = vmul.f32 %v1944, %v2458
    %v2460 = vrcp.pop %v2392
    %v2461 = vmul.f32 %v1945, %v2460
    %v2462 = vrcp.pop %v2396
    %v2463 = vmul.f32 %v1946, %v2462
    %v2464 = vrcp.pop %v2400
    %v2465 = vmul.f32 %v1947, %v2464
    %v2466 = vadd.f32 %v2403, %v2176
    %v2467 = vadd.f32 %v2405, %v2176
    %v2468 = vadd.f32 %v2407, %v2176
    %v2469 = vadd.f32 %v2409, %v2176
    %v2470 = vadd.f32 %v2411, %v2176
    %v2471 = vadd.f32 %v2413, %v2176
    %v2472 = vadd.f32 %v2415, %v2176
    %v2473 = vadd.f32 %v2417, %v2176
    %v2474 = vadd.f32 %v2419, %v2176
    %v2475 = vadd.f32 %v2421, %v2176
    %v2476 = vadd.f32 %v2423, %v2176
    %v2477 = vadd.f32 %v2425, %v2176
    %v2478 = vadd.f32 %v2427, %v2176
    %v2479 = vadd.f32 %v2429, %v2176
    %v2480 = vadd.f32 %v2431, %v2176
    %v2481 = vadd.f32 %v2433, %v2176
    %v2482 = vadd.f32 %v2435, %v2176
    %v2483 = vadd.f32 %v2437, %v2176
    %v2484 = vadd.f32 %v2439, %v2176
    %v2485 = vadd.f32 %v2441, %v2176
    %v2486 = vadd.f32 %v2443, %v2176
    %v2487 = vadd.f32 %v2445, %v2176
    %v2488 = vadd.f32 %v2447, %v2176
    %v2489 = vadd.f32 %v2449, %v2176
    %v2490 = vadd.f32 %v2451, %v2176
    %v2491 = vadd.f32 %v2453, %v2176
    %v2492 = vadd.f32 %v2455, %v2176
    %v2493 = vadd.f32 %v2457, %v2176
    %v2494 = vadd.f32 %v2459, %v2176
    %v2495 = vadd.f32 %v2461, %v2176
    %v2496 = vadd.f32 %v2463, %v2176
    %v2497 = vadd.f32 %v2465, %v2176
    %v2498 = vmax.f32 %v2466, 0.0
    %v2499 = vmax.f32 %v2467, 0.0
    %v2500 = vmax.f32 %v2468, 0.0
    %v2501 = vmax.f32 %v2469, 0.0
    %v2502 = vmax.f32 %v2470, 0.0
    %v2503 = vmax.f32 %v2471, 0.0
    %v2504 = vmax.f32 %v2472, 0.0
    %v2505 = vmax.f32 %v2473, 0.0
    %v2506 = vmax.f32 %v2474, 0.0
    %v2507 = vmax.f32 %v2475, 0.0
    %v2508 = vmax.f32 %v2476, 0.0
    %v2509 = vmax.f32 %v2477, 0.0
    %v2510 = vmax.f32 %v2478, 0.0
    %v2511 = vmax.f32 %v2479, 0.0
    %v2512 = vmax.f32 %v2480, 0.0
    %v2513 = vmax.f32 %v2481, 0.0
    %v2514 = vmax.f32 %v2482, 0.0
    %v2515 = vmax.f32 %v2483, 0.0
    %v2516 = vmax.f32 %v2484, 0.0
    %v2517 = vmax.f32 %v2485, 0.0
    %v2518 = vmax.f32 %v2486, 0.0
    %v2519 = vmax.f32 %v2487, 0.0
    %v2520 = vmax.f32 %v2488, 0.0
    %v2521 = vmax.f32 %v2489, 0.0
    %v2522 = vmax.f32 %v2490, 0.0
    %v2523 = vmax.f32 %v2491, 0.0
    %v2524 = vmax.f32 %v2492, 0.0
    %v2525 = vmax.f32 %v2493, 0.0
    %v2526 = vmax.f32 %v2494, 0.0
    %v2527 = vmax.f32 %v2495, 0.0
    %v2528 = vmax.f32 %v2496, 0.0
    %v2529 = vmax.f32 %v2497, 0.0
    %2530 = vst [vmem:[%s4 + $0x8] sm:$0xff] %v2498
    %2531 = vst [vmem:[%s4 + $0x18] sm:$0xff] %v2499
    %2532 = vst [vmem:[%s4 + $0x28] sm:$0xff] %v2500
    %2533 = vst [vmem:[%s4 + $0x38] sm:$0xff] %v2501
    %2534 = vst [vmem:[%s4 + $0x48] sm:$0xff] %v2502
    %2535 = vst [vmem:[%s4 + $0x58] sm:$0xff] %v2503
    %2536 = vst [vmem:[%s4 + $0x68] sm:$0xff] %v2504
    %2537 = vst [vmem:[%s4 + $0x78] sm:$0xff] %v2505
    %2538 = vst [vmem:[%s4 + $0x88] sm:$0xff] %v2506
    %2539 = vst [vmem:[%s4 + $0x98] sm:$0xff] %v2507
    %2540 = vst [vmem:[%s4 + $0xa8] sm:$0xff] %v2508
    %2541 = vst [vmem:[%s4 + $0xb8] sm:$0xff] %v2509
    %2542 = vst [vmem:[%s4 + $0xc8] sm:$0xff] %v2510
    %2543 = vst [vmem:[%s4 + $0xd8] sm:$0xff] %v2511
    %2544 = vst [vmem:[%s4 + $0xe8] sm:$0xff] %v2512
    %2545 = vst [vmem:[%s4 + $0xf8] sm:$0xff] %v2513
    %2546 = vst [vmem:[%s4 + $0x108] sm:$0xff] %v2514
    %2547 = vst [vmem:[%s4 + $0x118] sm:$0xff] %v2515
    %2548 = vst [vmem:[%s4 + $0x128] sm:$0xff] %v2516
    %2549 = vst [vmem:[%s4 + $0x138] sm:$0xff] %v2517
    %2550 = vst [vmem:[%s4 + $0x148] sm:$0xff] %v2518
    %2551 = vst [vmem:[%s4 + $0x158] sm:$0xff] %v2519
    %2552 = vst [vmem:[%s4 + $0x168] sm:$0xff] %v2520
    %2553 = vst [vmem:[%s4 + $0x178] sm:$0xff] %v2521
    %2554 = vst [vmem:[%s4 + $0x188] sm:$0xff] %v2522
    %2555 = vst [vmem:[%s4 + $0x198] sm:$0xff] %v2523
    %2556 = vst [vmem:[%s4 + $0x1a8] sm:$0xff] %v2524
    %2557 = vst [vmem:[%s4 + $0x1b8] sm:$0xff] %v2525
    %2558 = vst [vmem:[%s4 + $0x1c8] sm:$0xff] %v2526
    %2559 = vst [vmem:[%s4 + $0x1d8] sm:$0xff] %v2527
    %2560 = vst [vmem:[%s4 + $0x1e8] sm:$0xff] %v2528
    %2561 = vst [vmem:[%s4 + $0x1f8] sm:$0xff] %v2529
  $region25: #{dgi_forward_padded.4} parent=0 // pred_fallthru
    _
  // Predicated region
  $region26: #{dgi_forward_padded.4} parent=0 // pred_check
    _
  $region27: #{dgi_forward_padded.4} parent=0 // pred_check_branch
    %2563 = sbr.rel (0) target = $region29
  $region28: #{dgi_forward_padded.4} parent=0 // pred_region
    _
  $region29: #{dgi_forward_padded.4} parent=0 // pred_fallthru
    _
  // Predicated region
  $region30: #{dgi_forward_padded.4} parent=0 // pred_check
    _
  $region31: #{dgi_forward_padded.4} parent=0 // pred_check_branch
    %2565 = sbr.rel (0) target = $region33
  $region32: #{dgi_forward_padded.4} parent=0 // pred_region
    _
  $region33: #{dgi_forward_padded.4} parent=0 // pred_fallthru
    _

</llo_original>
